<compile_context>
chip_gen: v7x
topology: tpu7x:2x2x1
jax: 0.10.0
libtpu: 0.0.40
codegen_flags: <defaults>
</compile_context>

<pallas_src>
import jax
import jax.numpy as jnp
from jax.experimental import pallas as pl
from jax.experimental.pallas import tpu as pltpu


D_IN = 3      # input features of the diffusion MLP
D_OUT = 3     # real output features
D_PAD = 128   # lane-dense padded output width


def _round_up(a, m):
    return (a + m - 1) // m * m


def mlp_diffusion_kernel(t_ref, x_ref, r0_ref, r1_ref, r2_ref, r3_ref, b3_ref, o_ref):
    tile_b, d_in = x_ref.shape
    t_pad = r0_ref.shape[0]          # 128-padded (d_in + n_steps)

    # Combined aux block, built once and reused by every layer:
    #   lanes [0, d_in)            -> x
    #   lanes [d_in, d_in+n_steps) -> one_hot(t)
    #   remaining lanes            -> 0
    lane = jax.lax.broadcasted_iota(jnp.int32, (tile_b, t_pad), 1)
    onehot = (lane == (t_ref[...] + d_in)).astype(jnp.bfloat16)     # zero in x lanes
    xb = x_ref[...].astype(jnp.bfloat16)
    x_pad = jnp.concatenate(
        [xb, jnp.zeros((tile_b, t_pad - d_in), jnp.bfloat16)], axis=1)
    aux = onehot + x_pad                                            # (tile_b, t_pad)

    # Block 0: [x | onehot] @ [W0 ; E0+b0]  (single K=128 matmul), then ReLU.
    h = jnp.dot(aux, r0_ref[...], preferred_element_type=jnp.float32)
    h = jnp.maximum(h, 0.0)

    # Block 1: [h | x | onehot] @ [W1 ; 0 ; E1+b1], then ReLU.
    lhs = jnp.concatenate([h.astype(jnp.bfloat16), aux], axis=1)
    h = jnp.maximum(jnp.dot(lhs, r1_ref[...], preferred_element_type=jnp.float32), 0.0)

    # Block 2: [h | x | onehot] @ [W2 ; 0 ; E2+b2], then ReLU.
    lhs = jnp.concatenate([h.astype(jnp.bfloat16), aux], axis=1)
    h = jnp.maximum(jnp.dot(lhs, r2_ref[...], preferred_element_type=jnp.float32), 0.0)

    # Final Linear(U -> 3), zero-padded to 128 output lanes (lane-dense store).
    out = jnp.dot(h.astype(jnp.bfloat16), r3_ref[...], preferred_element_type=jnp.float32)
    o_ref[...] = (out + b3_ref[...]).astype(o_ref.dtype)


def mlp_diffusion_forward(x, t, params, *, tile_b=512):
    """x: (B, 3) float32, t: (B,) int step indices in [0, n_steps).  Returns (B, 3) f32.

    tile_b is a swept parameter: ~256 on v5e, 512-1024 on v6e/v7x.  On v7x pick
    tile_b so the resulting grid length is even (both TensorCores get work).
    """
    assert tile_b % 8 == 0
    B = x.shape[0]
    U = params["r3"].shape[0]
    t_pad = params["r0"].shape[0]
    assert U % 128 == 0, "hidden size must be a multiple of 128 for lane alignment"

    # Pad the batch to a multiple of tile_b; padded rows are sliced off below.
    B_pad = _round_up(B, tile_b)
    if B_pad != B:
        x = jnp.pad(x, ((0, B_pad - B), (0, 0)))
        t = jnp.pad(t, (0, B_pad - B))
    x = x.astype(jnp.float32)
    t2d = t.astype(jnp.int32).reshape(B_pad, 1)

    grid = (B_pad // tile_b,)

    def stream_spec(shape):                  # per-batch-tile (double-buffered)
        return pl.BlockSpec(shape, lambda i: (i, 0))

    def resident_spec(shape):                # grid-invariant (fetched once)
        return pl.BlockSpec(shape, lambda i: (0, 0))

    in_specs = [
        stream_spec((tile_b, 1)),            # t indices (i32)
        stream_spec((tile_b, D_IN)),         # x
        resident_spec((t_pad, U)),           # fused [W0 ; E0+b0], bf16
        resident_spec((U + t_pad, U)),       # fused [W1 ; 0 ; E1+b1], bf16
        resident_spec((U + t_pad, U)),       # fused [W2 ; 0 ; E2+b2], bf16
        resident_spec((U, D_PAD)),           # W3 zero-padded, bf16
        resident_spec((1, D_PAD)),           # b3 zero-padded, f32
    ]
    out_spec = stream_spec((tile_b, D_PAD))

    # --- VMEM budget: actual footprint (no double counting), clamped. -------
    bpe16, bpe32 = 2, 4
    resident = (t_pad * U + 2 * (U + t_pad) * U + U * D_PAD) * bpe16 + D_PAD * bpe32
    resident *= 2                                   # pipeline keeps 2 buffers/operand
    # streamed blocks pad their last dim to 128 lanes in VMEM; 2 buffers each
    stream = 2 * tile_b * 128 * (bpe32 * 3)         # t(i32), x(f32), out(f32)
    # live activations: aux, concat LHS, h (f32 + bf16 copy), padded out
    work = tile_b * (t_pad * bpe16 + (U + t_pad) * bpe16
                     + U * (bpe32 + bpe16) + D_PAD * bpe32)
    vmem_bytes = int(1.5 * (resident + stream + work))          # 50% compiler headroom
    vmem_bytes = int(min(max(vmem_bytes, 24 * 1024 * 1024), 48 * 1024 * 1024))

    out = pl.pallas_call(
        mlp_diffusion_kernel,
        out_shape=jax.ShapeDtypeStruct((B_pad, D_PAD), jnp.float32),
        grid=grid,
        in_specs=in_specs,
        out_specs=out_spec,
        compiler_params=pltpu.CompilerParams(
            dimension_semantics=("parallel",),      # lets v7x shard tiles over 2 TCs
            vmem_limit_bytes=vmem_bytes,
        ),
    )(t2d, x,
      params["r0"], params["r1"], params["r2"], params["r3"], params["b3"])
    return out[:B, :D_OUT]


def init_torch_like_params(key, n_steps, num_units):
    """Parameters with PyTorch nn.Linear layout: W is (out, in), b is (out,)."""
    ks = jax.random.split(key, 11)
    s = 0.02
    U = num_units
    return {
        "lin0_w": s * jax.random.normal(ks[0], (U, D_IN), jnp.float32),
        "lin0_b": s * jax.random.normal(ks[1], (U,), jnp.float32),
        "lin1_w": s * jax.random.normal(ks[2], (U, U), jnp.float32),
        "lin1_b": s * jax.random.normal(ks[3], (U,), jnp.float32),
        "lin2_w": s * jax.random.normal(ks[4], (U, U), jnp.float32),
        "lin2_b": s * jax.random.normal(ks[5], (U,), jnp.float32),
        "lin3_w": s * jax.random.normal(ks[6], (D_OUT, U), jnp.float32),
        "lin3_b": s * jax.random.normal(ks[7], (D_OUT,), jnp.float32),
        "emb0": s * jax.random.normal(ks[8], (n_steps, U), jnp.float32),
        "emb1": s * jax.random.normal(ks[9], (n_steps, U), jnp.float32),
        "emb2": s * jax.random.normal(ks[10], (n_steps, U), jnp.float32),
    }


def prepare_params(tp):
    """PyTorch layout -> fused kernel layout (done once, host-side):

       r0 (t_pad, U)      rows [0,3)=W0^T, rows [3,3+n)=E0+b0, rest 0
       r1 (U+t_pad, U)    rows [0,U)=W1^T, rows [U+3,U+3+n)=E1+b1, rest 0
       r2 (U+t_pad, U)    same layout with W2/E2
       r3 (U, 128)        cols [0,3)=W3^T, rest 0          (all above bf16)
       b3 (1, 128)        cols [0,3)=b3, rest 0            (f32, exact VPU add)
    """
    U = tp["lin1_w"].shape[0]
    n_steps = tp["emb0"].shape[0]
    t_pad = _round_up(D_IN + n_steps, 128)

    r0 = jnp.zeros((t_pad, U), jnp.float32)
    r0 = r0.at[:D_IN].set(tp["lin0_w"].T)
    r0 = r0.at[D_IN:D_IN + n_steps].set(tp["emb0"] + tp["lin0_b"][None, :])

    def stacked(w, emb, b):
        r = jnp.zeros((U + t_pad, U), jnp.float32)
        r = r.at[:U].set(w.T)
        r = r.at[U + D_IN:U + D_IN + n_steps].set(emb + b[None, :])
        return r.astype(jnp.bfloat16)

    r3 = jnp.zeros((U, D_PAD), jnp.float32).at[:, :D_OUT].set(tp["lin3_w"].T)
    b3 = jnp.zeros((1, D_PAD), jnp.float32).at[:, :D_OUT].set(tp["lin3_b"][None, :])

    return {
        "r0": r0.astype(jnp.bfloat16),
        "r1": stacked(tp["lin1_w"], tp["emb1"], tp["lin1_b"]),
        "r2": stacked(tp["lin2_w"], tp["emb2"], tp["lin2_b"]),
        "r3": r3.astype(jnp.bfloat16),
        "b3": b3,
    }


def reference_forward(x, t, kp):
    """Pure-JAX reference mirroring the kernel's fused bf16/f32-accumulate math."""
    t_pad = kp["r0"].shape[0]
    lane = jnp.arange(t_pad)[None, :]
    onehot = (lane == (t[:, None] + D_IN)).astype(jnp.bfloat16)
    x_pad = jnp.concatenate(
        [x.astype(jnp.bfloat16),
         jnp.zeros((x.shape[0], t_pad - D_IN), jnp.bfloat16)], axis=1)
    aux = onehot + x_pad

    def dot(a, w):
        return jnp.dot(a, w, preferred_element_type=jnp.float32)

    h = jnp.maximum(dot(aux, kp["r0"]), 0.0)
    h = jnp.maximum(dot(jnp.concatenate([h.astype(jnp.bfloat16), aux], 1), kp["r1"]), 0.0)
    h = jnp.maximum(dot(jnp.concatenate([h.astype(jnp.bfloat16), aux], 1), kp["r2"]), 0.0)
    out = dot(h.astype(jnp.bfloat16), kp["r3"]) + kp["b3"]
    return out[:, :D_OUT]


def f32_reference_forward(x, t, tp):
    """Full-precision reference of the original PyTorch forward()."""
    hp = jax.lax.Precision.HIGHEST
    h = jnp.maximum(jnp.dot(x, tp["lin0_w"].T, precision=hp) + tp["lin0_b"] + tp["emb0"][t], 0.0)
    h = jnp.maximum(jnp.dot(h, tp["lin1_w"].T, precision=hp) + tp["lin1_b"] + tp["emb1"][t], 0.0)
    h = jnp.maximum(jnp.dot(h, tp["lin2_w"].T, precision=hp) + tp["lin2_b"] + tp["emb2"][t], 0.0)
    return jnp.dot(h, tp["lin3_w"].T, precision=hp) + tp["lin3_b"]


if __name__ == "__main__":
    key = jax.random.PRNGKey(0)
    k_param, k_x, k_t = jax.random.split(key, 3)

    n_steps = 100
    num_units = 256   # small hidden size for the demo (module default is 1024)
    B = 500           # deliberately not a multiple of tile_b (exercises padding)
    tile_b = 128      # demo tile; 512+ recommended at production sizes

    torch_params = init_torch_like_params(k_param, n_steps, num_units)
    kparams = prepare_params(torch_params)

    x = jax.random.normal(k_x, (B, D_IN), jnp.float32)
    t = jax.random.randint(k_t, (B,), 0, n_steps, jnp.int32)

    out = mlp_diffusion_forward(x, t, kparams, tile_b=tile_b)
    out = jax.block_until_ready(out)
    assert out.shape == (B, D_OUT)

    # Exact check against the same bf16-weight / f32-accumulate recipe.
    ref = reference_forward(x, t, kparams)
    assert jnp.allclose(out, ref, atol=1e-4, rtol=1e-3), \
        float(jnp.max(jnp.abs(out - ref)))

    # Sanity check against the full-f32 PyTorch-style forward (bf16 weights => loose tol).
    ref32 = f32_reference_forward(x, t, torch_params)
    assert jnp.allclose(out, ref32, atol=5e-3, rtol=5e-2), \
        float(jnp.max(jnp.abs(out - ref32)))

    print("KERNEL_OK")
</pallas_src>

<mosaic_0001>
module attributes {stable_mosaic.version = 11 : i64} {
  func.func @mlp_diffusion_kernel(%arg0: i32, %arg1: memref<128x1xi32, #tpu.memory_space<vmem>>, %arg2: memref<128x3xf32, #tpu.memory_space<vmem>>, %arg3: memref<128x256xbf16, #tpu.memory_space<vmem>>, %arg4: memref<384x256xbf16, #tpu.memory_space<vmem>>, %arg5: memref<384x256xbf16, #tpu.memory_space<vmem>>, %arg6: memref<256x128xbf16, #tpu.memory_space<vmem>>, %arg7: memref<1x128xf32, #tpu.memory_space<vmem>>, %arg8: memref<128x128xf32, #tpu.memory_space<vmem>>) attributes {dimension_semantics = [#tpu.dimension_semantics<parallel>], iteration_bounds = array<i64: 4>, scalar_prefetch = 0 : i64, scratch_operands = 0 : i64, tpu.core_type = #tpu.core_type<tc>, window_params = [{transform_indices = @transform_0, window_bounds = array<i64: 128, 1>}, {transform_indices = @transform_1, window_bounds = array<i64: 128, 3>}, {pipeline_mode = #tpu.pipeline_mode<synchronous>, transform_indices = @transform_2, window_bounds = array<i64: 128, 256>}, {pipeline_mode = #tpu.pipeline_mode<synchronous>, transform_indices = @transform_3, window_bounds = array<i64: 384, 256>}, {pipeline_mode = #tpu.pipeline_mode<synchronous>, transform_indices = @transform_4, window_bounds = array<i64: 384, 256>}, {pipeline_mode = #tpu.pipeline_mode<synchronous>, transform_indices = @transform_5, window_bounds = array<i64: 256, 128>}, {pipeline_mode = #tpu.pipeline_mode<synchronous>, transform_indices = @transform_6, window_bounds = array<i64: 1, 128>}, {transform_indices = @transform_7, window_bounds = array<i64: 128, 128>}]} {
    %0 = tpu.iota {dimensions = array<i32: 1>} : vector<128x128xi32>
    %c0 = arith.constant 0 : index
    %c0_0 = arith.constant 0 : index
    %1 = vector.load %arg1[%c0, %c0_0] : memref<128x1xi32, #tpu.memory_space<vmem>>, vector<128x1xi32>
    %c3_i32 = arith.constant 3 : i32
    %2 = vector.broadcast %c3_i32 : i32 to vector<128x1xi32>
    %3 = arith.addi %1, %2 : vector<128x1xi32>
    %4 = vector.broadcast %3 : vector<128x1xi32> to vector<128x128xi32>
    %5 = arith.cmpi eq, %0, %4 : vector<128x128xi32>
    %6 = arith.extui %5 : vector<128x128xi1> to vector<128x128xi32>
    %7 = arith.sitofp %6 : vector<128x128xi32> to vector<128x128xf32>
    %8 = arith.truncf %7 : vector<128x128xf32> to vector<128x128xbf16>
    %c0_1 = arith.constant 0 : index
    %c0_2 = arith.constant 0 : index
    %9 = vector.load %arg2[%c0_1, %c0_2] : memref<128x3xf32, #tpu.memory_space<vmem>>, vector<128x3xf32>
    %10 = arith.truncf %9 : vector<128x3xf32> to vector<128x3xbf16>
    %cst = arith.constant 0.000000e+00 : bf16
    %11 = vector.broadcast %cst : bf16 to vector<128x125xbf16>
    %12 = tpu.concatenate %10, %11 in 1 : vector<128x3xbf16>, vector<128x125xbf16> -> vector<128x128xbf16>
    %13 = arith.addf %8, %12 : vector<128x128xbf16>
    %c0_3 = arith.constant 0 : index
    %c0_4 = arith.constant 0 : index
    %14 = vector.load %arg3[%c0_3, %c0_4] : memref<128x256xbf16, #tpu.memory_space<vmem>>, vector<128x256xbf16>
    %cst_5 = arith.constant dense<0.000000e+00> : vector<128x256xf32>
    %15 = tpu.matmul %13, %14, %cst_5 {dimension_numbers = #tpu.dot_dimension_numbers<[1], [0], [0], [1], [0, 0, 1, 1], [], []>} : vector<128x128xbf16>, vector<128x256xbf16>, vector<128x256xf32> -> vector<128x256xf32>
    %cst_6 = arith.constant 0.000000e+00 : f32
    %16 = vector.broadcast %cst_6 : f32 to vector<128x256xf32>
    %17 = arith.maximumf %15, %16 : vector<128x256xf32>
    %18 = arith.truncf %17 : vector<128x256xf32> to vector<128x256xbf16>
    %19 = tpu.concatenate %18, %13 in 1 : vector<128x256xbf16>, vector<128x128xbf16> -> vector<128x384xbf16>
    %c0_7 = arith.constant 0 : index
    %c0_8 = arith.constant 0 : index
    %20 = vector.load %arg4[%c0_7, %c0_8] : memref<384x256xbf16, #tpu.memory_space<vmem>>, vector<384x256xbf16>
    %cst_9 = arith.constant dense<0.000000e+00> : vector<128x256xf32>
    %21 = tpu.matmul %19, %20, %cst_9 {dimension_numbers = #tpu.dot_dimension_numbers<[1], [0], [0], [1], [0, 0, 1, 1], [], []>} : vector<128x384xbf16>, vector<384x256xbf16>, vector<128x256xf32> -> vector<128x256xf32>
    %cst_10 = arith.constant 0.000000e+00 : f32
    %22 = vector.broadcast %cst_10 : f32 to vector<128x256xf32>
    %23 = arith.maximumf %21, %22 : vector<128x256xf32>
    %24 = arith.truncf %23 : vector<128x256xf32> to vector<128x256xbf16>
    %25 = tpu.concatenate %24, %13 in 1 : vector<128x256xbf16>, vector<128x128xbf16> -> vector<128x384xbf16>
    %c0_11 = arith.constant 0 : index
    %c0_12 = arith.constant 0 : index
    %26 = vector.load %arg5[%c0_11, %c0_12] : memref<384x256xbf16, #tpu.memory_space<vmem>>, vector<384x256xbf16>
    %cst_13 = arith.constant dense<0.000000e+00> : vector<128x256xf32>
    %27 = tpu.matmul %25, %26, %cst_13 {dimension_numbers = #tpu.dot_dimension_numbers<[1], [0], [0], [1], [0, 0, 1, 1], [], []>} : vector<128x384xbf16>, vector<384x256xbf16>, vector<128x256xf32> -> vector<128x256xf32>
    %cst_14 = arith.constant 0.000000e+00 : f32
    %28 = vector.broadcast %cst_14 : f32 to vector<128x256xf32>
    %29 = arith.maximumf %27, %28 : vector<128x256xf32>
    %30 = arith.truncf %29 : vector<128x256xf32> to vector<128x256xbf16>
    %c0_15 = arith.constant 0 : index
    %c0_16 = arith.constant 0 : index
    %31 = vector.load %arg6[%c0_15, %c0_16] : memref<256x128xbf16, #tpu.memory_space<vmem>>, vector<256x128xbf16>
    %cst_17 = arith.constant dense<0.000000e+00> : vector<128x128xf32>
    %32 = tpu.matmul %30, %31, %cst_17 {dimension_numbers = #tpu.dot_dimension_numbers<[1], [0], [0], [1], [0, 0, 1, 1], [], []>} : vector<128x256xbf16>, vector<256x128xbf16>, vector<128x128xf32> -> vector<128x128xf32>
    %c0_18 = arith.constant 0 : index
    %c0_19 = arith.constant 0 : index
    %33 = vector.load %arg7[%c0_18, %c0_19] : memref<1x128xf32, #tpu.memory_space<vmem>>, vector<1x128xf32>
    %34 = vector.broadcast %33 : vector<1x128xf32> to vector<128x128xf32>
    %35 = arith.addf %32, %34 : vector<128x128xf32>
    %c0_20 = arith.constant 0 : index
    %c0_21 = arith.constant 0 : index
    %36 = vector.load %arg8[%c0_20, %c0_21] : memref<128x128xf32, #tpu.memory_space<vmem>>, vector<128x128xf32>
    tpu.vector_store %arg8[%c0_20, %c0_21], %35 {strides = array<i32>} : memref<128x128xf32, #tpu.memory_space<vmem>>, vector<128x128xf32>,
    return
  }
  func.func @transform_0(%arg0: i32) -> (i32, i32) {
    %c0_i32 = arith.constant 0 : i32
    %c0_i32_0 = arith.constant 0 : i32
    return %arg0, %c0_i32 : i32, i32
  }
  func.func @transform_1(%arg0: i32) -> (i32, i32) {
    %c0_i32 = arith.constant 0 : i32
    %c0_i32_0 = arith.constant 0 : i32
    return %arg0, %c0_i32 : i32, i32
  }
  func.func @transform_2(%arg0: i32) -> (i32, i32) {
    %c0_i32 = arith.constant 0 : i32
    %c0_i32_0 = arith.constant 0 : i32
    %c0_i32_1 = arith.constant 0 : i32
    return %c0_i32, %c0_i32_0 : i32, i32
  }
  func.func @transform_3(%arg0: i32) -> (i32, i32) {
    %c0_i32 = arith.constant 0 : i32
    %c0_i32_0 = arith.constant 0 : i32
    %c0_i32_1 = arith.constant 0 : i32
    return %c0_i32, %c0_i32_0 : i32, i32
  }
  func.func @transform_4(%arg0: i32) -> (i32, i32) {
    %c0_i32 = arith.constant 0 : i32
    %c0_i32_0 = arith.constant 0 : i32
    %c0_i32_1 = arith.constant 0 : i32
    return %c0_i32, %c0_i32_0 : i32, i32
  }
  func.func @transform_5(%arg0: i32) -> (i32, i32) {
    %c0_i32 = arith.constant 0 : i32
    %c0_i32_0 = arith.constant 0 : i32
    %c0_i32_1 = arith.constant 0 : i32
    return %c0_i32, %c0_i32_0 : i32, i32
  }
  func.func @transform_6(%arg0: i32) -> (i32, i32) {
    %c0_i32 = arith.constant 0 : i32
    %c0_i32_0 = arith.constant 0 : i32
    %c0_i32_1 = arith.constant 0 : i32
    return %c0_i32, %c0_i32_0 : i32, i32
  }
  func.func @transform_7(%arg0: i32) -> (i32, i32) {
    %c0_i32 = arith.constant 0 : i32
    %c0_i32_0 = arith.constant 0 : i32
    return %arg0, %c0_i32 : i32, i32
  }
}

</mosaic_0001>

<llo_original>
// kernel: tpu_custom_call.1
$region0: #{tpu_custom_call.1}
  #allocation0 [shape = 'u32[]', space=smem, size = 0x4, offset = 0x4, fixed_abs, tag = 'smem constant byte address 0x4 - core index']
  #allocation1 [shape = 'u32[144,128]{1,0:T(1,128)}', space=vmem, size = 0x12000, scoped, tag = 'internal scratch']
  %s0 = inlined_call_operand.vmem [shape: s32[512,1], index: 0, kind: input, shape index: {}]
  %s1 = inlined_call_operand.vmem [shape: f32[512,3], index: 1, kind: input, shape index: {}]
  %s2 = inlined_call_operand.vmem [shape: bf16[128,256], index: 2, kind: input, shape index: {}]
  %s3 = inlined_call_operand.vmem [shape: bf16[384,256], index: 3, kind: input, shape index: {}]
  %s4 = inlined_call_operand.vmem [shape: bf16[384,256], index: 4, kind: input, shape index: {}]
  %s5 = inlined_call_operand.vmem [shape: bf16[256,128], index: 5, kind: input, shape index: {}]
  %s6 = inlined_call_operand.vmem [shape: f32[1,128], index: 6, kind: input, shape index: {}]
  %s7 = inlined_call_operand.hbm [shape: f32[512,128], index: 7, kind: output, shape index: {}]
  %s8 = sld [smem:[#allocation0]]
  $region61: #{tpu_custom_call.1} parent=0
    _
  %s10 = ssub.s32 1, %s8
  %s11 = scalar_select 0, %s10, %s8
  $region1: #{tpu_custom_call.1} parent=0
    #allocation2 [shape = 'u8[131072]{0}', space=vmem, size = 0x20000, scoped, tag = 'output window, operand 0']
    #allocation3 [shape = 's32[2]{0}', space=sflag, size = 0x8, scoped, tag = 'scoped memory for tpu_custom_call.1']
    %12 = vsyncpa [#allocation3], 0
    %s13 = scalar_lea.sflag [#allocation3], 1
    %14 = vsyncpa %s13, 0
    loop: start=0, step=1, limit=6
    $region2: #{tpu_custom_call.1} parent=1 // loop_pre_header
      _
    $region3: #{tpu_custom_call.1} parent=1 // loop_header
      %s16 = sphi 0, %s20
      %p17 = scmp.ge.s32.totalorder %s16, 6
      %s26 = sphi 0, %s28
      %s29 = sphi 0, %s26
      %s30 = sphi 0, %s29
      %s46 = sphi 0, %s30
      %s52 = sphi 0, %s54
      %s55 = sphi 0, %s52
      %s56 = sphi 0, %s55
      %s72 = sphi 0, %s56
      %s76 = sphi 0, %s76
      %s78 = sphi 0, %s76
      %s79 = sphi 0, %s78
      %s93 = sphi 0, %s79
      %s97 = sphi 0, %s97
      %s99 = sphi 0, %s97
      %s100 = sphi 0, %s99
      %s114 = sphi 0, %s100
      %s118 = sphi 0, %s118
      %s120 = sphi 0, %s118
      %s121 = sphi 0, %s120
      %s135 = sphi 0, %s121
      %s139 = sphi 0, %s139
      %s141 = sphi 0, %s139
      %s142 = sphi 0, %s141
      %s156 = sphi 0, %s142
      %s160 = sphi 0, %s160
      %s162 = sphi 0, %s160
      %s163 = sphi 0, %s162
      %s177 = sphi 0, %s163
      %s183 = sphi 0, %s185
      %s186 = sphi 0, %s183
      %s187 = sphi 0, %s186
      %s203 = sphi 0, %s187
    $region4: #{tpu_custom_call.1} parent=1 // loop_header_branch
      %19 = sbr.rel (%p17) target = $region8
    $region5: #{tpu_custom_call.1} parent=1 // loop_body
      %s21 = ssub.s32 %s16, 1
      %s22 = ssub.s32 %s16, 2
      %s23 = sadd.s32 %s16, 1
      %s24 = ssub.s32 %s16, %s23
      %p25 = scmp.eq.s32.totalorder %s24, 0
      %s27 = sadd.s32 %s26, 1
      %s28 = scalar_select %p25, %s26, %s27
      %p31 = pneg %p25
      %p32 = scmp.eq.s32.totalorder %s16, 3
      %p33 = por %p31, %p32
      %p34 = scmp.ne.s32.totalorder %s26, %s29
      %p35 = scmp.eq.s32.totalorder %s16, 0
      %p36 = por %p34, %p35
      %p37 = scmp.ne.s32.totalorder %s26, %s29
      %p38 = scmp.eq.s32.totalorder %s21, 3
      %p39 = por %p37, %p38
      %p40 = scmp.ne.s32.totalorder %s29, %s30
      %p41 = scmp.eq.s32.totalorder %s21, 0
      %p42 = por %p40, %p41
      %p43 = scmp.ne.s32.totalorder %s29, %s30
      %p44 = scmp.eq.s32.totalorder %s22, 3
      %p45 = por %p43, %p44
      %p47 = scmp.ne.s32.totalorder %s30, %s46
      %p48 = scmp.eq.s32.totalorder %s22, 0
      %p49 = por %p47, %p48
      %s50 = ssub.s32 %s16, %s23
      %p51 = scmp.eq.s32.totalorder %s50, 0
      %s53 = sadd.s32 %s52, 1
      %s54 = scalar_select %p51, %s52, %s53
      %p57 = pneg %p51
      %p58 = scmp.eq.s32.totalorder %s16, 3
      %p59 = por %p57, %p58
      %p60 = scmp.ne.s32.totalorder %s52, %s55
      %p61 = scmp.eq.s32.totalorder %s16, 0
      %p62 = por %p60, %p61
      %p63 = scmp.ne.s32.totalorder %s52, %s55
      %p64 = scmp.eq.s32.totalorder %s21, 3
      %p65 = por %p63, %p64
      %p66 = scmp.ne.s32.totalorder %s55, %s56
      %p67 = scmp.eq.s32.totalorder %s21, 0
      %p68 = por %p66, %p67
      %p69 = scmp.ne.s32.totalorder %s55, %s56
      %p70 = scmp.eq.s32.totalorder %s22, 3
      %p71 = por %p69, %p70
      %p73 = scmp.ne.s32.totalorder %s56, %s72
      %p74 = scmp.eq.s32.totalorder %s22, 0
      %p75 = por %p73, %p74
      %s77 = sadd.s32 %s76, 1
      %p80 = scmp.eq.s32.totalorder %s16, 3
      %p81 = scmp.ne.s32.totalorder %s76, %s78
      %p82 = scmp.eq.s32.totalorder %s16, 0
      %p83 = por %p81, %p82
      %p84 = scmp.ne.s32.totalorder %s76, %s78
      %p85 = scmp.eq.s32.totalorder %s21, 3
      %p86 = por %p84, %p85
      %p87 = scmp.ne.s32.totalorder %s78, %s79
      %p88 = scmp.eq.s32.totalorder %s21, 0
      %p89 = por %p87, %p88
      %p90 = scmp.ne.s32.totalorder %s78, %s79
      %p91 = scmp.eq.s32.totalorder %s22, 3
      %p92 = por %p90, %p91
      %p94 = scmp.ne.s32.totalorder %s79, %s93
      %p95 = scmp.eq.s32.totalorder %s22, 0
      %p96 = por %p94, %p95
      %s98 = sadd.s32 %s97, 1
      %p101 = scmp.eq.s32.totalorder %s16, 3
      %p102 = scmp.ne.s32.totalorder %s97, %s99
      %p103 = scmp.eq.s32.totalorder %s16, 0
      %p104 = por %p102, %p103
      %p105 = scmp.ne.s32.totalorder %s97, %s99
      %p106 = scmp.eq.s32.totalorder %s21, 3
      %p107 = por %p105, %p106
      %p108 = scmp.ne.s32.totalorder %s99, %s100
      %p109 = scmp.eq.s32.totalorder %s21, 0
      %p110 = por %p108, %p109
      %p111 = scmp.ne.s32.totalorder %s99, %s100
      %p112 = scmp.eq.s32.totalorder %s22, 3
      %p113 = por %p111, %p112
      %p115 = scmp.ne.s32.totalorder %s100, %s114
      %p116 = scmp.eq.s32.totalorder %s22, 0
      %p117 = por %p115, %p116
      %s119 = sadd.s32 %s118, 1
      %p122 = scmp.eq.s32.totalorder %s16, 3
      %p123 = scmp.ne.s32.totalorder %s118, %s120
      %p124 = scmp.eq.s32.totalorder %s16, 0
      %p125 = por %p123, %p124
      %p126 = scmp.ne.s32.totalorder %s118, %s120
      %p127 = scmp.eq.s32.totalorder %s21, 3
      %p128 = por %p126, %p127
      %p129 = scmp.ne.s32.totalorder %s120, %s121
      %p130 = scmp.eq.s32.totalorder %s21, 0
      %p131 = por %p129, %p130
      %p132 = scmp.ne.s32.totalorder %s120, %s121
      %p133 = scmp.eq.s32.totalorder %s22, 3
      %p134 = por %p132, %p133
      %p136 = scmp.ne.s32.totalorder %s121, %s135
      %p137 = scmp.eq.s32.totalorder %s22, 0
      %p138 = por %p136, %p137
      %s140 = sadd.s32 %s139, 1
      %p143 = scmp.eq.s32.totalorder %s16, 3
      %p144 = scmp.ne.s32.totalorder %s139, %s141
      %p145 = scmp.eq.s32.totalorder %s16, 0
      %p146 = por %p144, %p145
      %p147 = scmp.ne.s32.totalorder %s139, %s141
      %p148 = scmp.eq.s32.totalorder %s21, 3
      %p149 = por %p147, %p148
      %p150 = scmp.ne.s32.totalorder %s141, %s142
      %p151 = scmp.eq.s32.totalorder %s21, 0
      %p152 = por %p150, %p151
      %p153 = scmp.ne.s32.totalorder %s141, %s142
      %p154 = scmp.eq.s32.totalorder %s22, 3
      %p155 = por %p153, %p154
      %p157 = scmp.ne.s32.totalorder %s142, %s156
      %p158 = scmp.eq.s32.totalorder %s22, 0
      %p159 = por %p157, %p158
      %s161 = sadd.s32 %s160, 1
      %p164 = scmp.eq.s32.totalorder %s16, 3
      %p165 = scmp.ne.s32.totalorder %s160, %s162
      %p166 = scmp.eq.s32.totalorder %s16, 0
      %p167 = por %p165, %p166
      %p168 = scmp.ne.s32.totalorder %s160, %s162
      %p169 = scmp.eq.s32.totalorder %s21, 3
      %p170 = por %p168, %p169
      %p171 = scmp.ne.s32.totalorder %s162, %s163
      %p172 = scmp.eq.s32.totalorder %s21, 0
      %p173 = por %p171, %p172
      %p174 = scmp.ne.s32.totalorder %s162, %s163
      %p175 = scmp.eq.s32.totalorder %s22, 3
      %p176 = por %p174, %p175
      %p178 = scmp.ne.s32.totalorder %s163, %s177
      %p179 = scmp.eq.s32.totalorder %s22, 0
      %p180 = por %p178, %p179
      %s181 = ssub.s32 %s16, %s23
      %p182 = scmp.eq.s32.totalorder %s181, 0
      %s184 = sadd.s32 %s183, 1
      %s185 = scalar_select %p182, %s183, %s184
      %p188 = pneg %p182
      %p189 = scmp.eq.s32.totalorder %s16, 3
      %p190 = por %p188, %p189
      %p191 = scmp.ne.s32.totalorder %s183, %s186
      %p192 = scmp.eq.s32.totalorder %s16, 0
      %p193 = por %p191, %p192
      %p194 = scmp.ne.s32.totalorder %s183, %s186
      %p195 = scmp.eq.s32.totalorder %s21, 3
      %p196 = por %p194, %p195
      %p197 = scmp.ne.s32.totalorder %s186, %s187
      %p198 = scmp.eq.s32.totalorder %s21, 0
      %p199 = por %p197, %p198
      %p200 = scmp.ne.s32.totalorder %s186, %s187
      %p201 = scmp.eq.s32.totalorder %s22, 3
      %p202 = por %p200, %p201
      %p204 = scmp.ne.s32.totalorder %s187, %s203
      %p205 = scmp.eq.s32.totalorder %s22, 0
      %p206 = por %p204, %p205
      %p207 = scmp.le.s32.totalorder 1, %s16
      %p208 = scmp.lt.s32.totalorder %s16, 5
      %p209 = pnand %p207, %p208
      %p210 = pneg %p209
      // Predicated region
      $region9: #{tpu_custom_call.1} parent=5 // pred_check
        _
      $region10: #{tpu_custom_call.1} parent=5 // pred_check_branch
        %212 = sbr.rel (%p209) target = $region12
      $region11: #{tpu_custom_call.1} parent=5 // pred_region
        %s213 = ssub.s32 %s16, 1
        // Predicated region
        $region13: #{tpu_custom_call.1} parent=11 // pred_check
          %p214 = pneg %p89
        $region14: #{tpu_custom_call.1} parent=11 // pred_check_branch
          %216 = sbr.rel (%p214) target = $region16
        $region15: #{tpu_custom_call.1} parent=11 // pred_region
          _
        $region16: #{tpu_custom_call.1} parent=11 // pred_fallthru
          _
        // Predicated region
        $region17: #{tpu_custom_call.1} parent=11 // pred_check
          %p217 = pneg %p110
        $region18: #{tpu_custom_call.1} parent=11 // pred_check_branch
          %219 = sbr.rel (%p217) target = $region20
        $region19: #{tpu_custom_call.1} parent=11 // pred_region
          _
        $region20: #{tpu_custom_call.1} parent=11 // pred_fallthru
          _
        // Predicated region
        $region21: #{tpu_custom_call.1} parent=11 // pred_check
          %p220 = pneg %p131
        $region22: #{tpu_custom_call.1} parent=11 // pred_check_branch
          %222 = sbr.rel (%p220) target = $region24
        $region23: #{tpu_custom_call.1} parent=11 // pred_region
          _
        $region24: #{tpu_custom_call.1} parent=11 // pred_fallthru
          _
        // Predicated region
        $region25: #{tpu_custom_call.1} parent=11 // pred_check
          %p223 = pneg %p152
        $region26: #{tpu_custom_call.1} parent=11 // pred_check_branch
          %225 = sbr.rel (%p223) target = $region28
        $region27: #{tpu_custom_call.1} parent=11 // pred_region
          _
        $region28: #{tpu_custom_call.1} parent=11 // pred_fallthru
          _
        // Predicated region
        $region29: #{tpu_custom_call.1} parent=11 // pred_check
          %p226 = pneg %p173
        $region30: #{tpu_custom_call.1} parent=11 // pred_check_branch
          %228 = sbr.rel (%p226) target = $region32
        $region31: #{tpu_custom_call.1} parent=11 // pred_region
          _
        $region32: #{tpu_custom_call.1} parent=11 // pred_fallthru
          _
      $region12: #{tpu_custom_call.1} parent=5 // pred_fallthru
        _
      %p229 = scmp.lt.s32.totalorder %s16, 4
      // Predicated region
      $region33: #{tpu_custom_call.1} parent=5 // pred_check
        %p230 = pneg %p229
      $region34: #{tpu_custom_call.1} parent=5 // pred_check_branch
        %232 = sbr.rel (%p230) target = $region36
      $region35: #{tpu_custom_call.1} parent=5 // pred_region
        // Predicated region
        $region37: #{tpu_custom_call.1} parent=35 // pred_check
          %p233 = pneg %p36
        $region38: #{tpu_custom_call.1} parent=35 // pred_check_branch
          %235 = sbr.rel (%p233) target = $region40
        $region39: #{tpu_custom_call.1} parent=35 // pred_region
          %s236 = smul.u32 16, %s16
          %p237 = scmp.lt.s32.totalorder %s236, 63
          %s238 = scalar_select %p237, %s236, 63
          %s239 = smul.addr %s238, 8
          %s240 = scalar_lea.vmem %s0, %s239
          %s241 = smul.u32 16, %s16
        $region40: #{tpu_custom_call.1} parent=35 // pred_fallthru
          _
        // Predicated region
        $region41: #{tpu_custom_call.1} parent=35 // pred_check
          %p242 = pneg %p62
        $region42: #{tpu_custom_call.1} parent=35 // pred_check_branch
          %244 = sbr.rel (%p242) target = $region44
        $region43: #{tpu_custom_call.1} parent=35 // pred_region
          %s245 = smul.u32 16, %s16
          %p246 = scmp.lt.s32.totalorder %s245, 63
          %s247 = scalar_select %p246, %s245, 63
          %s248 = smul.addr %s247, 8
          %s249 = scalar_lea.vmem %s1, %s248
          %s250 = smul.u32 16, %s16
        $region44: #{tpu_custom_call.1} parent=35 // pred_fallthru
          _
      $region36: #{tpu_custom_call.1} parent=5 // pred_fallthru
        _
      %p251 = scmp.le.s32.totalorder 1, %s16
      %p252 = scmp.lt.s32.totalorder %s16, 5
      %p253 = pnand %p251, %p252
      %p254 = pneg %p253
      // Predicated region
      $region45: #{tpu_custom_call.1} parent=5 // pred_check
        _
      $region46: #{tpu_custom_call.1} parent=5 // pred_check_branch
        %256 = sbr.rel (%p253) target = $region48
      $region47: #{tpu_custom_call.1} parent=5 // pred_region
        %s257 = ssub.s32 %s16, 1
        %s258 = smul.u32 16, %s21
        %p259 = scmp.lt.s32.totalorder %s258, 63
        %s260 = scalar_select %p259, %s258, 63
        %s261 = smul.addr %s260, 8
        %s262 = scalar_lea.vmem %s0, %s261
        %p263 = pneg %p42
        %p264 = pneg %p39
        %s265 = smul.u32 16, %s21
        %p266 = scmp.lt.s32.totalorder %s265, 63
        %s267 = scalar_select %p266, %s265, 63
        %s268 = smul.addr %s267, 8
        %s269 = scalar_lea.vmem %s1, %s268
        %p270 = pneg %p68
        %p271 = pneg %p65
        %p272 = pneg %p89
        %p273 = pneg %p86
        %p274 = pneg %p110
        %p275 = pneg %p107
        %p276 = pneg %p131
        %p277 = pneg %p128
        %p278 = pneg %p152
        %p279 = pneg %p149
        %p280 = pneg %p173
        %p281 = pneg %p170
        %p282 = pneg %p199
        %p283 = pneg %p196
        %s284 = sand.u32 %s186, 1
        %s285 = scalar_lea.sflag [#allocation3], %s284
        %s286 = sand.u32 %s186, 1
        %s287 = smul.addr %s286, 128
        %s288 = scalar_lea.vmem [#allocation2], %s287
        %s289 = smul.u32 16, %s21
        %p290 = scmp.lt.s32.totalorder %s289, 63
        %s291 = scalar_select %p290, %s289, 63
        %s292 = smul.addr %s291, 8
        %s293 = scalar_lea.vmem %s0, %s292
        %s294 = smul.u32 16, %s21
        %s295 = smul.u32 16, %s21
        %p296 = scmp.lt.s32.totalorder %s295, 63
        %s297 = scalar_select %p296, %s295, 63
        %s298 = smul.addr %s297, 8
        %s299 = scalar_lea.vmem %s1, %s298
        %s300 = smul.u32 16, %s21
        %s301 = smul.u32 16, %s21
        %v303 = vlaneseq
        %v304 = vand.u32 %v303, 127
        %v305 = vld [vmem:[%s293] sm:$0xff]
        %v306 = vld [vmem:[%s293 + $0x8] sm:$0xff]
        %v307 = vld [vmem:[%s293 + $0x10] sm:$0xff]
        %v308 = vld [vmem:[%s293 + $0x18] sm:$0xff]
        %v309 = vld [vmem:[%s293 + $0x20] sm:$0xff]
        %v310 = vld [vmem:[%s293 + $0x28] sm:$0xff]
        %v311 = vld [vmem:[%s293 + $0x30] sm:$0xff]
        %v312 = vld [vmem:[%s293 + $0x38] sm:$0xff]
        %v313 = vld [vmem:[%s293 + $0x40] sm:$0xff]
        %v314 = vld [vmem:[%s293 + $0x48] sm:$0xff]
        %v315 = vld [vmem:[%s293 + $0x50] sm:$0xff]
        %v316 = vld [vmem:[%s293 + $0x58] sm:$0xff]
        %v317 = vld [vmem:[%s293 + $0x60] sm:$0xff]
        %v318 = vld [vmem:[%s293 + $0x68] sm:$0xff]
        %v319 = vld [vmem:[%s293 + $0x70] sm:$0xff]
        %v320 = vld [vmem:[%s293 + $0x78] sm:$0xff]
        %v321 = vadd.s32 %v305, 3
        %v322 = vadd.s32 %v306, 3
        %v323 = vadd.s32 %v307, 3
        %v324 = vadd.s32 %v308, 3
        %v325 = vadd.s32 %v309, 3
        %v326 = vadd.s32 %v310, 3
        %v327 = vadd.s32 %v311, 3
        %v328 = vadd.s32 %v312, 3
        %v329 = vadd.s32 %v313, 3
        %v330 = vadd.s32 %v314, 3
        %v331 = vadd.s32 %v315, 3
        %v332 = vadd.s32 %v316, 3
        %v333 = vadd.s32 %v317, 3
        %v334 = vadd.s32 %v318, 3
        %v335 = vadd.s32 %v319, 3
        %v336 = vadd.s32 %v320, 3
        %337 = vset.pattern.permute.xlu0 0
        %338 = vperm.xlu0 %337, %v321
        %v339 = vpop.permute.xlu0 %338
        %340 = vset.pattern.permute.xlu0 0
        %341 = vperm.xlu0 %340, %v322
        %v342 = vpop.permute.xlu0 %341
        %343 = vset.pattern.permute.xlu0 0
        %344 = vperm.xlu0 %343, %v323
        %v345 = vpop.permute.xlu0 %344
        %346 = vset.pattern.permute.xlu0 0
        %347 = vperm.xlu0 %346, %v324
        %v348 = vpop.permute.xlu0 %347
        %349 = vset.pattern.permute.xlu0 0
        %350 = vperm.xlu0 %349, %v325
        %v351 = vpop.permute.xlu0 %350
        %352 = vset.pattern.permute.xlu0 0
        %353 = vperm.xlu0 %352, %v326
        %v354 = vpop.permute.xlu0 %353
        %355 = vset.pattern.permute.xlu0 0
        %356 = vperm.xlu0 %355, %v327
        %v357 = vpop.permute.xlu0 %356
        %358 = vset.pattern.permute.xlu0 0
        %359 = vperm.xlu0 %358, %v328
        %v360 = vpop.permute.xlu0 %359
        %361 = vset.pattern.permute.xlu0 0
        %362 = vperm.xlu0 %361, %v329
        %v363 = vpop.permute.xlu0 %362
        %364 = vset.pattern.permute.xlu0 0
        %365 = vperm.xlu0 %364, %v330
        %v366 = vpop.permute.xlu0 %365
        %367 = vset.pattern.permute.xlu0 0
        %368 = vperm.xlu0 %367, %v331
        %v369 = vpop.permute.xlu0 %368
        %370 = vset.pattern.permute.xlu0 0
        %371 = vperm.xlu0 %370, %v332
        %v372 = vpop.permute.xlu0 %371
        %373 = vset.pattern.permute.xlu0 0
        %374 = vperm.xlu0 %373, %v333
        %v375 = vpop.permute.xlu0 %374
        %376 = vset.pattern.permute.xlu0 0
        %377 = vperm.xlu0 %376, %v334
        %v378 = vpop.permute.xlu0 %377
        %379 = vset.pattern.permute.xlu0 0
        %380 = vperm.xlu0 %379, %v335
        %v381 = vpop.permute.xlu0 %380
        %382 = vset.pattern.permute.xlu0 0
        %383 = vperm.xlu0 %382, %v336
        %v384 = vpop.permute.xlu0 %383
        %vm385 = vcmp.eq.s32.totalorder %v304, %v339
        %vm386 = vcmp.eq.s32.totalorder %v304, %v342
        %vm387 = vcmp.eq.s32.totalorder %v304, %v345
        %vm388 = vcmp.eq.s32.totalorder %v304, %v348
        %vm389 = vcmp.eq.s32.totalorder %v304, %v351
        %vm390 = vcmp.eq.s32.totalorder %v304, %v354
        %vm391 = vcmp.eq.s32.totalorder %v304, %v357
        %vm392 = vcmp.eq.s32.totalorder %v304, %v360
        %vm393 = vcmp.eq.s32.totalorder %v304, %v363
        %vm394 = vcmp.eq.s32.totalorder %v304, %v366
        %vm395 = vcmp.eq.s32.totalorder %v304, %v369
        %vm396 = vcmp.eq.s32.totalorder %v304, %v372
        %vm397 = vcmp.eq.s32.totalorder %v304, %v375
        %vm398 = vcmp.eq.s32.totalorder %v304, %v378
        %vm399 = vcmp.eq.s32.totalorder %v304, %v381
        %vm400 = vcmp.eq.s32.totalorder %v304, %v384
        %v401 = vsel %vm385, 1, 0
        %v402 = vsel %vm386, 1, 0
        %v403 = vsel %vm387, 1, 0
        %v404 = vsel %vm388, 1, 0
        %v405 = vsel %vm389, 1, 0
        %v406 = vsel %vm390, 1, 0
        %v407 = vsel %vm391, 1, 0
        %v408 = vsel %vm392, 1, 0
        %v409 = vsel %vm393, 1, 0
        %v410 = vsel %vm394, 1, 0
        %v411 = vsel %vm395, 1, 0
        %v412 = vsel %vm396, 1, 0
        %v413 = vsel %vm397, 1, 0
        %v414 = vsel %vm398, 1, 0
        %v415 = vsel %vm399, 1, 0
        %v416 = vsel %vm400, 1, 0
        %v417 = vcvt.s32.f32 %v401
        %v418 = vcvt.s32.f32 %v402
        %v419 = vcvt.s32.f32 %v403
        %v420 = vcvt.s32.f32 %v404
        %v421 = vcvt.s32.f32 %v405
        %v422 = vcvt.s32.f32 %v406
        %v423 = vcvt.s32.f32 %v407
        %v424 = vcvt.s32.f32 %v408
        %v425 = vcvt.s32.f32 %v409
        %v426 = vcvt.s32.f32 %v410
        %v427 = vcvt.s32.f32 %v411
        %v428 = vcvt.s32.f32 %v412
        %v429 = vcvt.s32.f32 %v413
        %v430 = vcvt.s32.f32 %v414
        %v431 = vcvt.s32.f32 %v415
        %v432 = vcvt.s32.f32 %v416
        %v433 = vpack.c.bf16 %v418, %v417
        %v434 = vpack.c.bf16 %v420, %v419
        %v435 = vpack.c.bf16 %v422, %v421
        %v436 = vpack.c.bf16 %v424, %v423
        %v437 = vpack.c.bf16 %v426, %v425
        %v438 = vpack.c.bf16 %v428, %v427
        %v439 = vpack.c.bf16 %v430, %v429
        %v440 = vpack.c.bf16 %v432, %v431
        %v441 = vld [vmem:[%s299] sm:$0xff]
        %v442 = vld [vmem:[%s299 + $0x8] sm:$0xff]
        %v443 = vld [vmem:[%s299 + $0x10] sm:$0xff]
        %v444 = vld [vmem:[%s299 + $0x18] sm:$0xff]
        %v445 = vld [vmem:[%s299 + $0x20] sm:$0xff]
        %v446 = vld [vmem:[%s299 + $0x28] sm:$0xff]
        %v447 = vld [vmem:[%s299 + $0x30] sm:$0xff]
        %v448 = vld [vmem:[%s299 + $0x38] sm:$0xff]
        %v449 = vld [vmem:[%s299 + $0x40] sm:$0xff]
        %v450 = vld [vmem:[%s299 + $0x48] sm:$0xff]
        %v451 = vld [vmem:[%s299 + $0x50] sm:$0xff]
        %v452 = vld [vmem:[%s299 + $0x58] sm:$0xff]
        %v453 = vld [vmem:[%s299 + $0x60] sm:$0xff]
        %v454 = vld [vmem:[%s299 + $0x68] sm:$0xff]
        %v455 = vld [vmem:[%s299 + $0x70] sm:$0xff]
        %v456 = vld [vmem:[%s299 + $0x78] sm:$0xff]
        %v457 = vpack.c.bf16 %v442, %v441
        %v458 = vpack.c.bf16 %v444, %v443
        %v459 = vpack.c.bf16 %v446, %v445
        %v460 = vpack.c.bf16 %v448, %v447
        %v461 = vpack.c.bf16 %v450, %v449
        %v462 = vpack.c.bf16 %v452, %v451
        %v463 = vpack.c.bf16 %v454, %v453
        %v464 = vpack.c.bf16 %v456, %v455
        %vm465 = vcmask 23552
        %v468 = vsel %vm465, %v457, 0
        %v471 = vsel %vm465, %v458, 0
        %v474 = vsel %vm465, %v459, 0
        %v477 = vsel %vm465, %v460, 0
        %v480 = vsel %vm465, %v461, 0
        %v483 = vsel %vm465, %v462, 0
        %v486 = vsel %vm465, %v463, 0
        %v489 = vsel %vm465, %v464, 0
        %v491 = vadd.bf16 %v433, %v468
        %v492 = vadd.bf16 %v434, %v471
        %v493 = vadd.bf16 %v435, %v474
        %v494 = vadd.bf16 %v436, %v477
        %v495 = vadd.bf16 %v437, %v480
        %v496 = vadd.bf16 %v438, %v483
        %v497 = vadd.bf16 %v439, %v486
        %v498 = vadd.bf16 %v440, %v489
        %v499 = vld [vmem:[%s2] sm:$0xff]
        %v500 = vld [vmem:[%s2 + $0x8] sm:$0xff]
        %v501 = vld [vmem:[%s2 + $0x10] sm:$0xff]
        %v502 = vld [vmem:[%s2 + $0x18] sm:$0xff]
        %v503 = vld [vmem:[%s2 + $0x20] sm:$0xff]
        %v504 = vld [vmem:[%s2 + $0x28] sm:$0xff]
        %v505 = vld [vmem:[%s2 + $0x30] sm:$0xff]
        %v506 = vld [vmem:[%s2 + $0x38] sm:$0xff]
        %v507 = vld [vmem:[%s2 + $0x40] sm:$0xff]
        %v508 = vld [vmem:[%s2 + $0x48] sm:$0xff]
        %v509 = vld [vmem:[%s2 + $0x50] sm:$0xff]
        %v510 = vld [vmem:[%s2 + $0x58] sm:$0xff]
        %v511 = vld [vmem:[%s2 + $0x60] sm:$0xff]
        %v512 = vld [vmem:[%s2 + $0x68] sm:$0xff]
        %v513 = vld [vmem:[%s2 + $0x70] sm:$0xff]
        %v514 = vld [vmem:[%s2 + $0x78] sm:$0xff]
        %v531 = vunpack.c.l.b16 %v499
        %v532 = vunpack.c.h.b16 %v499
        %v533 = vunpack.c.l.b16 %v500
        %v534 = vunpack.c.h.b16 %v500
        %v535 = vunpack.c.l.b16 %v501
        %v536 = vunpack.c.h.b16 %v501
        %v537 = vunpack.c.l.b16 %v502
        %v538 = vunpack.c.h.b16 %v502
        %v539 = vunpack.c.l.b16 %v503
        %v540 = vunpack.c.h.b16 %v503
        %v541 = vunpack.c.l.b16 %v504
        %v542 = vunpack.c.h.b16 %v504
        %v543 = vunpack.c.l.b16 %v505
        %v544 = vunpack.c.h.b16 %v505
        %v545 = vunpack.c.l.b16 %v506
        %v546 = vunpack.c.h.b16 %v506
        %v547 = vunpack.c.l.b16 %v507
        %v548 = vunpack.c.h.b16 %v507
        %v549 = vunpack.c.l.b16 %v508
        %v550 = vunpack.c.h.b16 %v508
        %v551 = vunpack.c.l.b16 %v509
        %v552 = vunpack.c.h.b16 %v509
        %v553 = vunpack.c.l.b16 %v510
        %v554 = vunpack.c.h.b16 %v510
        %v555 = vunpack.c.l.b16 %v511
        %v556 = vunpack.c.h.b16 %v511
        %v557 = vunpack.c.l.b16 %v512
        %v558 = vunpack.c.h.b16 %v512
        %v559 = vunpack.c.l.b16 %v513
        %v560 = vunpack.c.h.b16 %v513
        %v561 = vunpack.c.l.b16 %v514
        %v562 = vunpack.c.h.b16 %v514
        %v563 = vpack.c.b16 %v533, %v531
        %v564 = vpack.c.b16 %v534, %v532
        %v565 = vpack.c.b16 %v537, %v535
        %v566 = vpack.c.b16 %v538, %v536
        %v567 = vpack.c.b16 %v541, %v539
        %v568 = vpack.c.b16 %v542, %v540
        %v569 = vpack.c.b16 %v545, %v543
        %v570 = vpack.c.b16 %v546, %v544
        %v571 = vpack.c.b16 %v549, %v547
        %v572 = vpack.c.b16 %v550, %v548
        %v573 = vpack.c.b16 %v553, %v551
        %v574 = vpack.c.b16 %v554, %v552
        %v575 = vpack.c.b16 %v557, %v555
        %v576 = vpack.c.b16 %v558, %v556
        %v577 = vpack.c.b16 %v561, %v559
        %v578 = vpack.c.b16 %v562, %v560
        %595 = vmatprep.subr.bf16.mxu0 %v564
        %596 = vmatpush1.bf16.msra.mxu0 %v563
        %597 = vmatprep.subr.bf16.mxu0 %v566
        %598 = vmatpush1.bf16.msra.mxu0 %v565
        %599 = vmatprep.subr.bf16.mxu0 %v568
        %600 = vmatpush1.bf16.msra.mxu0 %v567
        %601 = vmatprep.subr.bf16.mxu0 %v570
        %602 = vmatpush1.bf16.msra.mxu0 %v569
        %603 = vmatprep.subr.bf16.mxu0 %v572
        %604 = vmatpush1.bf16.msra.mxu0 %v571
        %605 = vmatprep.subr.bf16.mxu0 %v574
        %606 = vmatpush1.bf16.msra.mxu0 %v573
        %607 = vmatprep.subr.bf16.mxu0 %v576
        %608 = vmatpush1.bf16.msra.mxu0 %v575
        %609 = vmatprep.subr.bf16.mxu0 %v578
        %610 = vmatpush1.bf16.msra.mxu0 %v577
        %611 = vmatprep.subr.bf16.mxu0 0
        %612 = vmatpush1.bf16.msra.mxu0 0
        %613 = vmatprep.subr.bf16.mxu0 0
        %614 = vmatpush1.bf16.msra.mxu0 0
        %615 = vmatprep.subr.bf16.mxu0 0
        %616 = vmatpush1.bf16.msra.mxu0 0
        %617 = vmatprep.subr.bf16.mxu0 0
        %618 = vmatpush1.bf16.msra.mxu0 0
        %619 = vmatprep.subr.bf16.mxu0 0
        %620 = vmatpush1.bf16.msra.mxu0 0
        %621 = vmatprep.subr.bf16.mxu0 0
        %622 = vmatpush1.bf16.msra.mxu0 0
        %623 = vmatprep.subr.bf16.mxu0 0
        %624 = vmatpush1.bf16.msra.mxu0 0
        %625 = vmatprep.subr.bf16.mxu0 0
        %626 = vmatpush1.bf16.msra.mxu0 0
        %627 = vmatprep.mubr.bf16.mxu0 0
        %628 = vmatmul.mubr.bf16.gmra.mrb[0].mxu0 %v491
        %v629 = vpop.f32.mrb[0].mxu0
        %v630 = vadd.f32 0.0, %v629
        %v631 = vpop.f32.mrb[0].mxu0
        %v632 = vadd.f32 0.0, %v631
        %v633 = vpop.f32.mrb[0].mxu0
        %v634 = vadd.f32 0.0, %v633
        %v635 = vpop.f32.mrb[0].mxu0
        %v636 = vadd.f32 0.0, %v635
        %637 = vmatprep.mubr.bf16.mxu0 0
        %638 = vmatmul.mubr.bf16.gmra.mrb[0].mxu0 %v492
        %v639 = vpop.f32.mrb[0].mxu0
        %v640 = vadd.f32 0.0, %v639
        %v641 = vpop.f32.mrb[0].mxu0
        %v642 = vadd.f32 0.0, %v641
        %v643 = vpop.f32.mrb[0].mxu0
        %v644 = vadd.f32 0.0, %v643
        %v645 = vpop.f32.mrb[0].mxu0
        %v646 = vadd.f32 0.0, %v645
        %647 = vmatprep.mubr.bf16.mxu0 0
        %648 = vmatmul.mubr.bf16.gmra.mrb[0].mxu0 %v493
        %v649 = vpop.f32.mrb[0].mxu0
        %v650 = vadd.f32 0.0, %v649
        %v651 = vpop.f32.mrb[0].mxu0
        %v652 = vadd.f32 0.0, %v651
        %v653 = vpop.f32.mrb[0].mxu0
        %v654 = vadd.f32 0.0, %v653
        %v655 = vpop.f32.mrb[0].mxu0
        %v656 = vadd.f32 0.0, %v655
        %657 = vmatprep.mubr.bf16.mxu0 0
        %658 = vmatmul.mubr.bf16.gmra.mrb[0].mxu0 %v494
        %v659 = vpop.f32.mrb[0].mxu0
        %v660 = vadd.f32 0.0, %v659
        %v661 = vpop.f32.mrb[0].mxu0
        %v662 = vadd.f32 0.0, %v661
        %v663 = vpop.f32.mrb[0].mxu0
        %v664 = vadd.f32 0.0, %v663
        %v665 = vpop.f32.mrb[0].mxu0
        %v666 = vadd.f32 0.0, %v665
        %667 = vmatprep.mubr.bf16.mxu0 0
        %668 = vmatmul.mubr.bf16.gmra.mrb[0].mxu0 %v495
        %v669 = vpop.f32.mrb[0].mxu0
        %v670 = vadd.f32 0.0, %v669
        %v671 = vpop.f32.mrb[0].mxu0
        %v672 = vadd.f32 0.0, %v671
        %v673 = vpop.f32.mrb[0].mxu0
        %v674 = vadd.f32 0.0, %v673
        %v675 = vpop.f32.mrb[0].mxu0
        %v676 = vadd.f32 0.0, %v675
        %677 = vmatprep.mubr.bf16.mxu0 0
        %678 = vmatmul.mubr.bf16.gmra.mrb[0].mxu0 %v496
        %v679 = vpop.f32.mrb[0].mxu0
        %v680 = vadd.f32 0.0, %v679
        %v681 = vpop.f32.mrb[0].mxu0
        %v682 = vadd.f32 0.0, %v681
        %v683 = vpop.f32.mrb[0].mxu0
        %v684 = vadd.f32 0.0, %v683
        %v685 = vpop.f32.mrb[0].mxu0
        %v686 = vadd.f32 0.0, %v685
        %687 = vmatprep.mubr.bf16.mxu0 0
        %688 = vmatmul.mubr.bf16.gmra.mrb[0].mxu0 %v497
        %v689 = vpop.f32.mrb[0].mxu0
        %v690 = vadd.f32 0.0, %v689
        %v691 = vpop.f32.mrb[0].mxu0
        %v692 = vadd.f32 0.0, %v691
        %v693 = vpop.f32.mrb[0].mxu0
        %v694 = vadd.f32 0.0, %v693
        %v695 = vpop.f32.mrb[0].mxu0
        %v696 = vadd.f32 0.0, %v695
        %697 = vmatprep.mubr.bf16.mxu0 0
        %698 = vmatmul.mubr.bf16.gmra.mrb[0].mxu0 %v498
        %v699 = vpop.f32.mrb[0].mxu0
        %v700 = vadd.f32 0.0, %v699
        %v701 = vpop.f32.mrb[0].mxu0
        %v702 = vadd.f32 0.0, %v701
        %v703 = vpop.f32.mrb[0].mxu0
        %v704 = vadd.f32 0.0, %v703
        %v705 = vpop.f32.mrb[0].mxu0
        %v706 = vadd.f32 0.0, %v705
        %707 = vdwg.mxu0
        %v708 = vmax.f32 %v630, 0.0
        %v709 = vmax.f32 %v632, 0.0
        %v710 = vmax.f32 %v634, 0.0
        %v711 = vmax.f32 %v636, 0.0
        %v712 = vmax.f32 %v640, 0.0
        %v713 = vmax.f32 %v642, 0.0
        %v714 = vmax.f32 %v644, 0.0
        %v715 = vmax.f32 %v646, 0.0
        %v716 = vmax.f32 %v650, 0.0
        %v717 = vmax.f32 %v652, 0.0
        %v718 = vmax.f32 %v654, 0.0
        %v719 = vmax.f32 %v656, 0.0
        %v720 = vmax.f32 %v660, 0.0
        %v721 = vmax.f32 %v662, 0.0
        %v722 = vmax.f32 %v664, 0.0
        %v723 = vmax.f32 %v666, 0.0
        %v724 = vmax.f32 %v670, 0.0
        %v725 = vmax.f32 %v672, 0.0
        %v726 = vmax.f32 %v674, 0.0
        %v727 = vmax.f32 %v676, 0.0
        %v728 = vmax.f32 %v680, 0.0
        %v729 = vmax.f32 %v682, 0.0
        %v730 = vmax.f32 %v684, 0.0
        %v731 = vmax.f32 %v686, 0.0
        %v732 = vmax.f32 %v690, 0.0
        %v733 = vmax.f32 %v692, 0.0
        %v734 = vmax.f32 %v694, 0.0
        %v735 = vmax.f32 %v696, 0.0
        %v736 = vmax.f32 %v700, 0.0
        %v737 = vmax.f32 %v702, 0.0
        %v738 = vmax.f32 %v704, 0.0
        %v739 = vmax.f32 %v706, 0.0
        %v740 = vpack.c.bf16 %v710, %v708
        %v741 = vpack.c.bf16 %v711, %v709
        %v742 = vpack.c.bf16 %v714, %v712
        %v743 = vpack.c.bf16 %v715, %v713
        %v744 = vpack.c.bf16 %v718, %v716
        %v745 = vpack.c.bf16 %v719, %v717
        %v746 = vpack.c.bf16 %v722, %v720
        %v747 = vpack.c.bf16 %v723, %v721
        %v748 = vpack.c.bf16 %v726, %v724
        %v749 = vpack.c.bf16 %v727, %v725
        %v750 = vpack.c.bf16 %v730, %v728
        %v751 = vpack.c.bf16 %v731, %v729
        %v752 = vpack.c.bf16 %v734, %v732
        %v753 = vpack.c.bf16 %v735, %v733
        %v754 = vpack.c.bf16 %v738, %v736
        %v755 = vpack.c.bf16 %v739, %v737
        %v756 = vld [vmem:[%s3] sm:$0xff]
        %v757 = vld [vmem:[%s3 + $0x8] sm:$0xff]
        %v758 = vld [vmem:[%s3 + $0x10] sm:$0xff]
        %v759 = vld [vmem:[%s3 + $0x18] sm:$0xff]
        %v760 = vld [vmem:[%s3 + $0x20] sm:$0xff]
        %v761 = vld [vmem:[%s3 + $0x28] sm:$0xff]
        %v762 = vld [vmem:[%s3 + $0x30] sm:$0xff]
        %v763 = vld [vmem:[%s3 + $0x38] sm:$0xff]
        %v764 = vld [vmem:[%s3 + $0x40] sm:$0xff]
        %v765 = vld [vmem:[%s3 + $0x48] sm:$0xff]
        %v766 = vld [vmem:[%s3 + $0x50] sm:$0xff]
        %v767 = vld [vmem:[%s3 + $0x58] sm:$0xff]
        %v768 = vld [vmem:[%s3 + $0x60] sm:$0xff]
        %v769 = vld [vmem:[%s3 + $0x68] sm:$0xff]
        %v770 = vld [vmem:[%s3 + $0x70] sm:$0xff]
        %v771 = vld [vmem:[%s3 + $0x78] sm:$0xff]
        %v772 = vld [vmem:[%s3 + $0x80] sm:$0xff]
        %v773 = vld [vmem:[%s3 + $0x88] sm:$0xff]
        %v774 = vld [vmem:[%s3 + $0x90] sm:$0xff]
        %v775 = vld [vmem:[%s3 + $0x98] sm:$0xff]
        %v776 = vld [vmem:[%s3 + $0xa0] sm:$0xff]
        %v777 = vld [vmem:[%s3 + $0xa8] sm:$0xff]
        %v778 = vld [vmem:[%s3 + $0xb0] sm:$0xff]
        %v779 = vld [vmem:[%s3 + $0xb8] sm:$0xff]
        %v780 = vld [vmem:[%s3 + $0xc0] sm:$0xff]
        %v781 = vld [vmem:[%s3 + $0xc8] sm:$0xff]
        %v782 = vld [vmem:[%s3 + $0xd0] sm:$0xff]
        %v783 = vld [vmem:[%s3 + $0xd8] sm:$0xff]
        %v784 = vld [vmem:[%s3 + $0xe0] sm:$0xff]
        %v785 = vld [vmem:[%s3 + $0xe8] sm:$0xff]
        %v786 = vld [vmem:[%s3 + $0xf0] sm:$0xff]
        %v787 = vld [vmem:[%s3 + $0xf8] sm:$0xff]
        %v788 = vld [vmem:[%s3 + $0x100] sm:$0xff]
        %v789 = vld [vmem:[%s3 + $0x108] sm:$0xff]
        %v790 = vld [vmem:[%s3 + $0x110] sm:$0xff]
        %v791 = vld [vmem:[%s3 + $0x118] sm:$0xff]
        %v792 = vld [vmem:[%s3 + $0x120] sm:$0xff]
        %v793 = vld [vmem:[%s3 + $0x128] sm:$0xff]
        %v794 = vld [vmem:[%s3 + $0x130] sm:$0xff]
        %v795 = vld [vmem:[%s3 + $0x138] sm:$0xff]
        %v796 = vld [vmem:[%s3 + $0x140] sm:$0xff]
        %v797 = vld [vmem:[%s3 + $0x148] sm:$0xff]
        %v798 = vld [vmem:[%s3 + $0x150] sm:$0xff]
        %v799 = vld [vmem:[%s3 + $0x158] sm:$0xff]
        %v800 = vld [vmem:[%s3 + $0x160] sm:$0xff]
        %v801 = vld [vmem:[%s3 + $0x168] sm:$0xff]
        %v802 = vld [vmem:[%s3 + $0x170] sm:$0xff]
        %v803 = vld [vmem:[%s3 + $0x178] sm:$0xff]
        %v852 = vunpack.c.l.b16 %v756
        %v853 = vunpack.c.h.b16 %v756
        %v854 = vunpack.c.l.b16 %v757
        %v855 = vunpack.c.h.b16 %v757
        %v856 = vunpack.c.l.b16 %v758
        %v857 = vunpack.c.h.b16 %v758
        %v858 = vunpack.c.l.b16 %v759
        %v859 = vunpack.c.h.b16 %v759
        %v860 = vunpack.c.l.b16 %v760
        %v861 = vunpack.c.h.b16 %v760
        %v862 = vunpack.c.l.b16 %v761
        %v863 = vunpack.c.h.b16 %v761
        %v864 = vunpack.c.l.b16 %v762
        %v865 = vunpack.c.h.b16 %v762
        %v866 = vunpack.c.l.b16 %v763
        %v867 = vunpack.c.h.b16 %v763
        %v868 = vunpack.c.l.b16 %v764
        %v869 = vunpack.c.h.b16 %v764
        %v870 = vunpack.c.l.b16 %v765
        %v871 = vunpack.c.h.b16 %v765
        %v872 = vunpack.c.l.b16 %v766
        %v873 = vunpack.c.h.b16 %v766
        %v874 = vunpack.c.l.b16 %v767
        %v875 = vunpack.c.h.b16 %v767
        %v876 = vunpack.c.l.b16 %v768
        %v877 = vunpack.c.h.b16 %v768
        %v878 = vunpack.c.l.b16 %v769
        %v879 = vunpack.c.h.b16 %v769
        %v880 = vunpack.c.l.b16 %v770
        %v881 = vunpack.c.h.b16 %v770
        %v882 = vunpack.c.l.b16 %v771
        %v883 = vunpack.c.h.b16 %v771
        %v884 = vunpack.c.l.b16 %v772
        %v885 = vunpack.c.h.b16 %v772
        %v886 = vunpack.c.l.b16 %v773
        %v887 = vunpack.c.h.b16 %v773
        %v888 = vunpack.c.l.b16 %v774
        %v889 = vunpack.c.h.b16 %v774
        %v890 = vunpack.c.l.b16 %v775
        %v891 = vunpack.c.h.b16 %v775
        %v892 = vunpack.c.l.b16 %v776
        %v893 = vunpack.c.h.b16 %v776
        %v894 = vunpack.c.l.b16 %v777
        %v895 = vunpack.c.h.b16 %v777
        %v896 = vunpack.c.l.b16 %v778
        %v897 = vunpack.c.h.b16 %v778
        %v898 = vunpack.c.l.b16 %v779
        %v899 = vunpack.c.h.b16 %v779
        %v900 = vunpack.c.l.b16 %v780
        %v901 = vunpack.c.h.b16 %v780
        %v902 = vunpack.c.l.b16 %v781
        %v903 = vunpack.c.h.b16 %v781
        %v904 = vunpack.c.l.b16 %v782
        %v905 = vunpack.c.h.b16 %v782
        %v906 = vunpack.c.l.b16 %v783
        %v907 = vunpack.c.h.b16 %v783
        %v908 = vunpack.c.l.b16 %v784
        %v909 = vunpack.c.h.b16 %v784
        %v910 = vunpack.c.l.b16 %v785
        %v911 = vunpack.c.h.b16 %v785
        %v912 = vunpack.c.l.b16 %v786
        %v913 = vunpack.c.h.b16 %v786
        %v914 = vunpack.c.l.b16 %v787
        %v915 = vunpack.c.h.b16 %v787
        %v916 = vunpack.c.l.b16 %v788
        %v917 = vunpack.c.h.b16 %v788
        %v918 = vunpack.c.l.b16 %v789
        %v919 = vunpack.c.h.b16 %v789
        %v920 = vunpack.c.l.b16 %v790
        %v921 = vunpack.c.h.b16 %v790
        %v922 = vunpack.c.l.b16 %v791
        %v923 = vunpack.c.h.b16 %v791
        %v924 = vunpack.c.l.b16 %v792
        %v925 = vunpack.c.h.b16 %v792
        %v926 = vunpack.c.l.b16 %v793
        %v927 = vunpack.c.h.b16 %v793
        %v928 = vunpack.c.l.b16 %v794
        %v929 = vunpack.c.h.b16 %v794
        %v930 = vunpack.c.l.b16 %v795
        %v931 = vunpack.c.h.b16 %v795
        %v932 = vunpack.c.l.b16 %v796
        %v933 = vunpack.c.h.b16 %v796
        %v934 = vunpack.c.l.b16 %v797
        %v935 = vunpack.c.h.b16 %v797
        %v936 = vunpack.c.l.b16 %v798
        %v937 = vunpack.c.h.b16 %v798
        %v938 = vunpack.c.l.b16 %v799
        %v939 = vunpack.c.h.b16 %v799
        %v940 = vunpack.c.l.b16 %v800
        %v941 = vunpack.c.h.b16 %v800
        %v942 = vunpack.c.l.b16 %v801
        %v943 = vunpack.c.h.b16 %v801
        %v944 = vunpack.c.l.b16 %v802
        %v945 = vunpack.c.h.b16 %v802
        %v946 = vunpack.c.l.b16 %v803
        %v947 = vunpack.c.h.b16 %v803
        %v948 = vpack.c.b16 %v854, %v852
        %v949 = vpack.c.b16 %v855, %v853
        %v950 = vpack.c.b16 %v858, %v856
        %v951 = vpack.c.b16 %v859, %v857
        %v952 = vpack.c.b16 %v862, %v860
        %v953 = vpack.c.b16 %v863, %v861
        %v954 = vpack.c.b16 %v866, %v864
        %v955 = vpack.c.b16 %v867, %v865
        %v956 = vpack.c.b16 %v870, %v868
        %v957 = vpack.c.b16 %v871, %v869
        %v958 = vpack.c.b16 %v874, %v872
        %v959 = vpack.c.b16 %v875, %v873
        %v960 = vpack.c.b16 %v878, %v876
        %v961 = vpack.c.b16 %v879, %v877
        %v962 = vpack.c.b16 %v882, %v880
        %v963 = vpack.c.b16 %v883, %v881
        %v964 = vpack.c.b16 %v886, %v884
        %v965 = vpack.c.b16 %v887, %v885
        %v966 = vpack.c.b16 %v890, %v888
        %v967 = vpack.c.b16 %v891, %v889
        %v968 = vpack.c.b16 %v894, %v892
        %v969 = vpack.c.b16 %v895, %v893
        %v970 = vpack.c.b16 %v898, %v896
        %v971 = vpack.c.b16 %v899, %v897
        %v972 = vpack.c.b16 %v902, %v900
        %v973 = vpack.c.b16 %v903, %v901
        %v974 = vpack.c.b16 %v906, %v904
        %v975 = vpack.c.b16 %v907, %v905
        %v976 = vpack.c.b16 %v910, %v908
        %v977 = vpack.c.b16 %v911, %v909
        %v978 = vpack.c.b16 %v914, %v912
        %v979 = vpack.c.b16 %v915, %v913
        %v980 = vpack.c.b16 %v918, %v916
        %v981 = vpack.c.b16 %v919, %v917
        %v982 = vpack.c.b16 %v922, %v920
        %v983 = vpack.c.b16 %v923, %v921
        %v984 = vpack.c.b16 %v926, %v924
        %v985 = vpack.c.b16 %v927, %v925
        %v986 = vpack.c.b16 %v930, %v928
        %v987 = vpack.c.b16 %v931, %v929
        %v988 = vpack.c.b16 %v934, %v932
        %v989 = vpack.c.b16 %v935, %v933
        %v990 = vpack.c.b16 %v938, %v936
        %v991 = vpack.c.b16 %v939, %v937
        %v992 = vpack.c.b16 %v942, %v940
        %v993 = vpack.c.b16 %v943, %v941
        %v994 = vpack.c.b16 %v946, %v944
        %v995 = vpack.c.b16 %v947, %v945
        %1044 = vmatprep.subr.bf16.mxu0 %v949
        %1045 = vmatpush1.bf16.msra.mxu0 %v948
        %1046 = vmatprep.subr.bf16.mxu0 %v951
        %1047 = vmatpush1.bf16.msra.mxu0 %v950
        %1048 = vmatprep.subr.bf16.mxu0 %v953
        %1049 = vmatpush1.bf16.msra.mxu0 %v952
        %1050 = vmatprep.subr.bf16.mxu0 %v955
        %1051 = vmatpush1.bf16.msra.mxu0 %v954
        %1052 = vmatprep.subr.bf16.mxu0 %v957
        %1053 = vmatpush1.bf16.msra.mxu0 %v956
        %1054 = vmatprep.subr.bf16.mxu0 %v959
        %1055 = vmatpush1.bf16.msra.mxu0 %v958
        %1056 = vmatprep.subr.bf16.mxu0 %v961
        %1057 = vmatpush1.bf16.msra.mxu0 %v960
        %1058 = vmatprep.subr.bf16.mxu0 %v963
        %1059 = vmatpush1.bf16.msra.mxu0 %v962
        %1060 = vmatprep.subr.bf16.mxu0 %v965
        %1061 = vmatpush1.bf16.msra.mxu0 %v964
        %1062 = vmatprep.subr.bf16.mxu0 %v967
        %1063 = vmatpush1.bf16.msra.mxu0 %v966
        %1064 = vmatprep.subr.bf16.mxu0 %v969
        %1065 = vmatpush1.bf16.msra.mxu0 %v968
        %1066 = vmatprep.subr.bf16.mxu0 %v971
        %1067 = vmatpush1.bf16.msra.mxu0 %v970
        %1068 = vmatprep.subr.bf16.mxu0 %v973
        %1069 = vmatpush1.bf16.msra.mxu0 %v972
        %1070 = vmatprep.subr.bf16.mxu0 %v975
        %1071 = vmatpush1.bf16.msra.mxu0 %v974
        %1072 = vmatprep.subr.bf16.mxu0 %v977
        %1073 = vmatpush1.bf16.msra.mxu0 %v976
        %1074 = vmatprep.subr.bf16.mxu0 %v979
        %1075 = vmatpush1.bf16.msra.mxu0 %v978
        %1076 = vmatprep.mubr.bf16.mxu0 %v741
        %1077 = vmatmul.mubr.bf16.gmra.mrb[0].mxu0 %v740
        %v1078 = vpop.f32.mrb[0].mxu0
        %v1079 = vadd.f32 0.0, %v1078
        %v1080 = vpop.f32.mrb[0].mxu0
        %v1081 = vadd.f32 0.0, %v1080
        %v1082 = vpop.f32.mrb[0].mxu0
        %v1083 = vadd.f32 0.0, %v1082
        %v1084 = vpop.f32.mrb[0].mxu0
        %v1085 = vadd.f32 0.0, %v1084
        %1086 = vmatprep.mubr.bf16.mxu0 %v743
        %1087 = vmatmul.mubr.bf16.gmra.mrb[0].mxu0 %v742
        %v1088 = vpop.f32.mrb[0].mxu0
        %v1089 = vadd.f32 0.0, %v1088
        %v1090 = vpop.f32.mrb[0].mxu0
        %v1091 = vadd.f32 0.0, %v1090
        %v1092 = vpop.f32.mrb[0].mxu0
        %v1093 = vadd.f32 0.0, %v1092
        %v1094 = vpop.f32.mrb[0].mxu0
        %v1095 = vadd.f32 0.0, %v1094
        %1096 = vmatprep.mubr.bf16.mxu0 %v745
        %1097 = vmatmul.mubr.bf16.gmra.mrb[0].mxu0 %v744
        %v1098 = vpop.f32.mrb[0].mxu0
        %v1099 = vadd.f32 0.0, %v1098
        %v1100 = vpop.f32.mrb[0].mxu0
        %v1101 = vadd.f32 0.0, %v1100
        %v1102 = vpop.f32.mrb[0].mxu0
        %v1103 = vadd.f32 0.0, %v1102
        %v1104 = vpop.f32.mrb[0].mxu0
        %v1105 = vadd.f32 0.0, %v1104
        %1106 = vmatprep.mubr.bf16.mxu0 %v747
        %1107 = vmatmul.mubr.bf16.gmra.mrb[0].mxu0 %v746
        %v1108 = vpop.f32.mrb[0].mxu0
        %v1109 = vadd.f32 0.0, %v1108
        %v1110 = vpop.f32.mrb[0].mxu0
        %v1111 = vadd.f32 0.0, %v1110
        %v1112 = vpop.f32.mrb[0].mxu0
        %v1113 = vadd.f32 0.0, %v1112
        %v1114 = vpop.f32.mrb[0].mxu0
        %v1115 = vadd.f32 0.0, %v1114
        %1116 = vmatprep.mubr.bf16.mxu0 %v749
        %1117 = vmatmul.mubr.bf16.gmra.mrb[0].mxu0 %v748
        %v1118 = vpop.f32.mrb[0].mxu0
        %v1119 = vadd.f32 0.0, %v1118
        %v1120 = vpop.f32.mrb[0].mxu0
        %v1121 = vadd.f32 0.0, %v1120
        %v1122 = vpop.f32.mrb[0].mxu0
        %v1123 = vadd.f32 0.0, %v1122
        %v1124 = vpop.f32.mrb[0].mxu0
        %v1125 = vadd.f32 0.0, %v1124
        %1126 = vmatprep.mubr.bf16.mxu0 %v751
        %1127 = vmatmul.mubr.bf16.gmra.mrb[0].mxu0 %v750
        %v1128 = vpop.f32.mrb[0].mxu0
        %v1129 = vadd.f32 0.0, %v1128
        %v1130 = vpop.f32.mrb[0].mxu0
        %v1131 = vadd.f32 0.0, %v1130
        %v1132 = vpop.f32.mrb[0].mxu0
        %v1133 = vadd.f32 0.0, %v1132
        %v1134 = vpop.f32.mrb[0].mxu0
        %v1135 = vadd.f32 0.0, %v1134
        %1136 = vmatprep.mubr.bf16.mxu0 %v753
        %1137 = vmatmul.mubr.bf16.gmra.mrb[0].mxu0 %v752
        %v1138 = vpop.f32.mrb[0].mxu0
        %v1139 = vadd.f32 0.0, %v1138
        %v1140 = vpop.f32.mrb[0].mxu0
        %v1141 = vadd.f32 0.0, %v1140
        %v1142 = vpop.f32.mrb[0].mxu0
        %v1143 = vadd.f32 0.0, %v1142
        %v1144 = vpop.f32.mrb[0].mxu0
        %v1145 = vadd.f32 0.0, %v1144
        %1146 = vmatprep.mubr.bf16.mxu0 %v755
        %1147 = vmatmul.mubr.bf16.gmra.mrb[0].mxu0 %v754
        %v1148 = vpop.f32.mrb[0].mxu0
        %v1149 = vadd.f32 0.0, %v1148
        %v1150 = vpop.f32.mrb[0].mxu0
        %v1151 = vadd.f32 0.0, %v1150
        %v1152 = vpop.f32.mrb[0].mxu0
        %v1153 = vadd.f32 0.0, %v1152
        %v1154 = vpop.f32.mrb[0].mxu0
        %v1155 = vadd.f32 0.0, %v1154
        %1156 = vdwg.mxu0
        %1157 = vmatprep.subr.bf16.mxu0 %v981
        %1158 = vmatpush1.bf16.msra.mxu0 %v980
        %1159 = vmatprep.subr.bf16.mxu0 %v983
        %1160 = vmatpush1.bf16.msra.mxu0 %v982
        %1161 = vmatprep.subr.bf16.mxu0 %v985
        %1162 = vmatpush1.bf16.msra.mxu0 %v984
        %1163 = vmatprep.subr.bf16.mxu0 %v987
        %1164 = vmatpush1.bf16.msra.mxu0 %v986
        %1165 = vmatprep.subr.bf16.mxu0 %v989
        %1166 = vmatpush1.bf16.msra.mxu0 %v988
        %1167 = vmatprep.subr.bf16.mxu0 %v991
        %1168 = vmatpush1.bf16.msra.mxu0 %v990
        %1169 = vmatprep.subr.bf16.mxu0 %v993
        %1170 = vmatpush1.bf16.msra.mxu0 %v992
        %1171 = vmatprep.subr.bf16.mxu0 %v995
        %1172 = vmatpush1.bf16.msra.mxu0 %v994
        %1173 = vmatprep.subr.bf16.mxu0 0
        %1174 = vmatpush1.bf16.msra.mxu0 0
        %1175 = vmatprep.subr.bf16.mxu0 0
        %1176 = vmatpush1.bf16.msra.mxu0 0
        %1177 = vmatprep.subr.bf16.mxu0 0
        %1178 = vmatpush1.bf16.msra.mxu0 0
        %1179 = vmatprep.subr.bf16.mxu0 0
        %1180 = vmatpush1.bf16.msra.mxu0 0
        %1181 = vmatprep.subr.bf16.mxu0 0
        %1182 = vmatpush1.bf16.msra.mxu0 0
        %1183 = vmatprep.subr.bf16.mxu0 0
        %1184 = vmatpush1.bf16.msra.mxu0 0
        %1185 = vmatprep.subr.bf16.mxu0 0
        %1186 = vmatpush1.bf16.msra.mxu0 0
        %1187 = vmatprep.subr.bf16.mxu0 0
        %1188 = vmatpush1.bf16.msra.mxu0 0
        %1189 = vmatprep.mubr.bf16.mxu0 0
        %1190 = vmatmul.mubr.bf16.gmra.mrb[0].mxu0 %v491
        %v1191 = vpop.f32.mrb[0].mxu0
        %v1192 = vadd.f32 %v1079, %v1191
        %v1193 = vpop.f32.mrb[0].mxu0
        %v1194 = vadd.f32 %v1081, %v1193
        %v1195 = vpop.f32.mrb[0].mxu0
        %v1196 = vadd.f32 %v1083, %v1195
        %v1197 = vpop.f32.mrb[0].mxu0
        %v1198 = vadd.f32 %v1085, %v1197
        %1199 = vmatprep.mubr.bf16.mxu0 0
        %1200 = vmatmul.mubr.bf16.gmra.mrb[0].mxu0 %v492
        %v1201 = vpop.f32.mrb[0].mxu0
        %v1202 = vadd.f32 %v1089, %v1201
        %v1203 = vpop.f32.mrb[0].mxu0
        %v1204 = vadd.f32 %v1091, %v1203
        %v1205 = vpop.f32.mrb[0].mxu0
        %v1206 = vadd.f32 %v1093, %v1205
        %v1207 = vpop.f32.mrb[0].mxu0
        %v1208 = vadd.f32 %v1095, %v1207
        %1209 = vmatprep.mubr.bf16.mxu0 0
        %1210 = vmatmul.mubr.bf16.gmra.mrb[0].mxu0 %v493
        %v1211 = vpop.f32.mrb[0].mxu0
        %v1212 = vadd.f32 %v1099, %v1211
        %v1213 = vpop.f32.mrb[0].mxu0
        %v1214 = vadd.f32 %v1101, %v1213
        %v1215 = vpop.f32.mrb[0].mxu0
        %v1216 = vadd.f32 %v1103, %v1215
        %v1217 = vpop.f32.mrb[0].mxu0
        %v1218 = vadd.f32 %v1105, %v1217
        %1219 = vmatprep.mubr.bf16.mxu0 0
        %1220 = vmatmul.mubr.bf16.gmra.mrb[0].mxu0 %v494
        %v1221 = vpop.f32.mrb[0].mxu0
        %v1222 = vadd.f32 %v1109, %v1221
        %v1223 = vpop.f32.mrb[0].mxu0
        %v1224 = vadd.f32 %v1111, %v1223
        %v1225 = vpop.f32.mrb[0].mxu0
        %v1226 = vadd.f32 %v1113, %v1225
        %v1227 = vpop.f32.mrb[0].mxu0
        %v1228 = vadd.f32 %v1115, %v1227
        %1229 = vmatprep.mubr.bf16.mxu0 0
        %1230 = vmatmul.mubr.bf16.gmra.mrb[0].mxu0 %v495
        %v1231 = vpop.f32.mrb[0].mxu0
        %v1232 = vadd.f32 %v1119, %v1231
        %v1233 = vpop.f32.mrb[0].mxu0
        %v1234 = vadd.f32 %v1121, %v1233
        %v1235 = vpop.f32.mrb[0].mxu0
        %v1236 = vadd.f32 %v1123, %v1235
        %v1237 = vpop.f32.mrb[0].mxu0
        %v1238 = vadd.f32 %v1125, %v1237
        %1239 = vmatprep.mubr.bf16.mxu0 0
        %1240 = vmatmul.mubr.bf16.gmra.mrb[0].mxu0 %v496
        %v1241 = vpop.f32.mrb[0].mxu0
        %v1242 = vadd.f32 %v1129, %v1241
        %v1243 = vpop.f32.mrb[0].mxu0
        %v1244 = vadd.f32 %v1131, %v1243
        %v1245 = vpop.f32.mrb[0].mxu0
        %v1246 = vadd.f32 %v1133, %v1245
        %v1247 = vpop.f32.mrb[0].mxu0
        %v1248 = vadd.f32 %v1135, %v1247
        %1249 = vmatprep.mubr.bf16.mxu0 0
        %1250 = vmatmul.mubr.bf16.gmra.mrb[0].mxu0 %v497
        %v1251 = vpop.f32.mrb[0].mxu0
        %v1252 = vadd.f32 %v1139, %v1251
        %v1253 = vpop.f32.mrb[0].mxu0
        %v1254 = vadd.f32 %v1141, %v1253
        %v1255 = vpop.f32.mrb[0].mxu0
        %v1256 = vadd.f32 %v1143, %v1255
        %v1257 = vpop.f32.mrb[0].mxu0
        %v1258 = vadd.f32 %v1145, %v1257
        %1259 = vmatprep.mubr.bf16.mxu0 0
        %1260 = vmatmul.mubr.bf16.gmra.mrb[0].mxu0 %v498
        %v1261 = vpop.f32.mrb[0].mxu0
        %v1262 = vadd.f32 %v1149, %v1261
        %v1263 = vpop.f32.mrb[0].mxu0
        %v1264 = vadd.f32 %v1151, %v1263
        %v1265 = vpop.f32.mrb[0].mxu0
        %v1266 = vadd.f32 %v1153, %v1265
        %v1267 = vpop.f32.mrb[0].mxu0
        %v1268 = vadd.f32 %v1155, %v1267
        %1269 = vdwg.mxu0
        %v1270 = vmax.f32 %v1192, 0.0
        %v1271 = vmax.f32 %v1194, 0.0
        %v1272 = vmax.f32 %v1196, 0.0
        %v1273 = vmax.f32 %v1198, 0.0
        %v1274 = vmax.f32 %v1202, 0.0
        %v1275 = vmax.f32 %v1204, 0.0
        %v1276 = vmax.f32 %v1206, 0.0
        %v1277 = vmax.f32 %v1208, 0.0
        %v1278 = vmax.f32 %v1212, 0.0
        %v1279 = vmax.f32 %v1214, 0.0
        %v1280 = vmax.f32 %v1216, 0.0
        %v1281 = vmax.f32 %v1218, 0.0
        %v1282 = vmax.f32 %v1222, 0.0
        %v1283 = vmax.f32 %v1224, 0.0
        %v1284 = vmax.f32 %v1226, 0.0
        %v1285 = vmax.f32 %v1228, 0.0
        %v1286 = vmax.f32 %v1232, 0.0
        %v1287 = vmax.f32 %v1234, 0.0
        %v1288 = vmax.f32 %v1236, 0.0
        %v1289 = vmax.f32 %v1238, 0.0
        %v1290 = vmax.f32 %v1242, 0.0
        %v1291 = vmax.f32 %v1244, 0.0
        %v1292 = vmax.f32 %v1246, 0.0
        %v1293 = vmax.f32 %v1248, 0.0
        %v1294 = vmax.f32 %v1252, 0.0
        %v1295 = vmax.f32 %v1254, 0.0
        %v1296 = vmax.f32 %v1256, 0.0
        %v1297 = vmax.f32 %v1258, 0.0
        %v1298 = vmax.f32 %v1262, 0.0
        %v1299 = vmax.f32 %v1264, 0.0
        %v1300 = vmax.f32 %v1266, 0.0
        %v1301 = vmax.f32 %v1268, 0.0
        %v1302 = vpack.c.bf16 %v1272, %v1270
        %v1303 = vpack.c.bf16 %v1273, %v1271
        %v1304 = vpack.c.bf16 %v1276, %v1274
        %v1305 = vpack.c.bf16 %v1277, %v1275
        %v1306 = vpack.c.bf16 %v1280, %v1278
        %v1307 = vpack.c.bf16 %v1281, %v1279
        %v1308 = vpack.c.bf16 %v1284, %v1282
        %v1309 = vpack.c.bf16 %v1285, %v1283
        %v1310 = vpack.c.bf16 %v1288, %v1286
        %v1311 = vpack.c.bf16 %v1289, %v1287
        %v1312 = vpack.c.bf16 %v1292, %v1290
        %v1313 = vpack.c.bf16 %v1293, %v1291
        %v1314 = vpack.c.bf16 %v1296, %v1294
        %v1315 = vpack.c.bf16 %v1297, %v1295
        %v1316 = vpack.c.bf16 %v1300, %v1298
        %v1317 = vpack.c.bf16 %v1301, %v1299
        %v1318 = vld [vmem:[%s4] sm:$0xff]
        %v1319 = vld [vmem:[%s4 + $0x8] sm:$0xff]
        %v1320 = vld [vmem:[%s4 + $0x10] sm:$0xff]
        %v1321 = vld [vmem:[%s4 + $0x18] sm:$0xff]
        %v1322 = vld [vmem:[%s4 + $0x20] sm:$0xff]
        %v1323 = vld [vmem:[%s4 + $0x28] sm:$0xff]
        %v1324 = vld [vmem:[%s4 + $0x30] sm:$0xff]
        %v1325 = vld [vmem:[%s4 + $0x38] sm:$0xff]
        %v1326 = vld [vmem:[%s4 + $0x40] sm:$0xff]
        %v1327 = vld [vmem:[%s4 + $0x48] sm:$0xff]
        %v1328 = vld [vmem:[%s4 + $0x50] sm:$0xff]
        %v1329 = vld [vmem:[%s4 + $0x58] sm:$0xff]
        %v1330 = vld [vmem:[%s4 + $0x60] sm:$0xff]
        %v1331 = vld [vmem:[%s4 + $0x68] sm:$0xff]
        %v1332 = vld [vmem:[%s4 + $0x70] sm:$0xff]
        %v1333 = vld [vmem:[%s4 + $0x78] sm:$0xff]
        %v1334 = vld [vmem:[%s4 + $0x80] sm:$0xff]
        %v1335 = vld [vmem:[%s4 + $0x88] sm:$0xff]
        %v1336 = vld [vmem:[%s4 + $0x90] sm:$0xff]
        %v1337 = vld [vmem:[%s4 + $0x98] sm:$0xff]
        %v1338 = vld [vmem:[%s4 + $0xa0] sm:$0xff]
        %v1339 = vld [vmem:[%s4 + $0xa8] sm:$0xff]
        %v1340 = vld [vmem:[%s4 + $0xb0] sm:$0xff]
        %v1341 = vld [vmem:[%s4 + $0xb8] sm:$0xff]
        %v1342 = vld [vmem:[%s4 + $0xc0] sm:$0xff]
        %v1343 = vld [vmem:[%s4 + $0xc8] sm:$0xff]
        %v1344 = vld [vmem:[%s4 + $0xd0] sm:$0xff]
        %v1345 = vld [vmem:[%s4 + $0xd8] sm:$0xff]
        %v1346 = vld [vmem:[%s4 + $0xe0] sm:$0xff]
        %v1347 = vld [vmem:[%s4 + $0xe8] sm:$0xff]
        %v1348 = vld [vmem:[%s4 + $0xf0] sm:$0xff]
        %v1349 = vld [vmem:[%s4 + $0xf8] sm:$0xff]
        %v1350 = vld [vmem:[%s4 + $0x100] sm:$0xff]
        %v1351 = vld [vmem:[%s4 + $0x108] sm:$0xff]
        %v1352 = vld [vmem:[%s4 + $0x110] sm:$0xff]
        %v1353 = vld [vmem:[%s4 + $0x118] sm:$0xff]
        %v1354 = vld [vmem:[%s4 + $0x120] sm:$0xff]
        %v1355 = vld [vmem:[%s4 + $0x128] sm:$0xff]
        %v1356 = vld [vmem:[%s4 + $0x130] sm:$0xff]
        %v1357 = vld [vmem:[%s4 + $0x138] sm:$0xff]
        %v1358 = vld [vmem:[%s4 + $0x140] sm:$0xff]
        %v1359 = vld [vmem:[%s4 + $0x148] sm:$0xff]
        %v1360 = vld [vmem:[%s4 + $0x150] sm:$0xff]
        %v1361 = vld [vmem:[%s4 + $0x158] sm:$0xff]
        %v1362 = vld [vmem:[%s4 + $0x160] sm:$0xff]
        %v1363 = vld [vmem:[%s4 + $0x168] sm:$0xff]
        %v1364 = vld [vmem:[%s4 + $0x170] sm:$0xff]
        %v1365 = vld [vmem:[%s4 + $0x178] sm:$0xff]
        %v1414 = vunpack.c.l.b16 %v1318
        %v1415 = vunpack.c.h.b16 %v1318
        %v1416 = vunpack.c.l.b16 %v1319
        %v1417 = vunpack.c.h.b16 %v1319
        %v1418 = vunpack.c.l.b16 %v1320
        %v1419 = vunpack.c.h.b16 %v1320
        %v1420 = vunpack.c.l.b16 %v1321
        %v1421 = vunpack.c.h.b16 %v1321
        %v1422 = vunpack.c.l.b16 %v1322
        %v1423 = vunpack.c.h.b16 %v1322
        %v1424 = vunpack.c.l.b16 %v1323
        %v1425 = vunpack.c.h.b16 %v1323
        %v1426 = vunpack.c.l.b16 %v1324
        %v1427 = vunpack.c.h.b16 %v1324
        %v1428 = vunpack.c.l.b16 %v1325
        %v1429 = vunpack.c.h.b16 %v1325
        %v1430 = vunpack.c.l.b16 %v1326
        %v1431 = vunpack.c.h.b16 %v1326
        %v1432 = vunpack.c.l.b16 %v1327
        %v1433 = vunpack.c.h.b16 %v1327
        %v1434 = vunpack.c.l.b16 %v1328
        %v1435 = vunpack.c.h.b16 %v1328
        %v1436 = vunpack.c.l.b16 %v1329
        %v1437 = vunpack.c.h.b16 %v1329
        %v1438 = vunpack.c.l.b16 %v1330
        %v1439 = vunpack.c.h.b16 %v1330
        %v1440 = vunpack.c.l.b16 %v1331
        %v1441 = vunpack.c.h.b16 %v1331
        %v1442 = vunpack.c.l.b16 %v1332
        %v1443 = vunpack.c.h.b16 %v1332
        %v1444 = vunpack.c.l.b16 %v1333
        %v1445 = vunpack.c.h.b16 %v1333
        %v1446 = vunpack.c.l.b16 %v1334
        %v1447 = vunpack.c.h.b16 %v1334
        %v1448 = vunpack.c.l.b16 %v1335
        %v1449 = vunpack.c.h.b16 %v1335
        %v1450 = vunpack.c.l.b16 %v1336
        %v1451 = vunpack.c.h.b16 %v1336
        %v1452 = vunpack.c.l.b16 %v1337
        %v1453 = vunpack.c.h.b16 %v1337
        %v1454 = vunpack.c.l.b16 %v1338
        %v1455 = vunpack.c.h.b16 %v1338
        %v1456 = vunpack.c.l.b16 %v1339
        %v1457 = vunpack.c.h.b16 %v1339
        %v1458 = vunpack.c.l.b16 %v1340
        %v1459 = vunpack.c.h.b16 %v1340
        %v1460 = vunpack.c.l.b16 %v1341
        %v1461 = vunpack.c.h.b16 %v1341
        %v1462 = vunpack.c.l.b16 %v1342
        %v1463 = vunpack.c.h.b16 %v1342
        %v1464 = vunpack.c.l.b16 %v1343
        %v1465 = vunpack.c.h.b16 %v1343
        %v1466 = vunpack.c.l.b16 %v1344
        %v1467 = vunpack.c.h.b16 %v1344
        %v1468 = vunpack.c.l.b16 %v1345
        %v1469 = vunpack.c.h.b16 %v1345
        %v1470 = vunpack.c.l.b16 %v1346
        %v1471 = vunpack.c.h.b16 %v1346
        %v1472 = vunpack.c.l.b16 %v1347
        %v1473 = vunpack.c.h.b16 %v1347
        %v1474 = vunpack.c.l.b16 %v1348
        %v1475 = vunpack.c.h.b16 %v1348
        %v1476 = vunpack.c.l.b16 %v1349
        %v1477 = vunpack.c.h.b16 %v1349
        %v1478 = vunpack.c.l.b16 %v1350
        %v1479 = vunpack.c.h.b16 %v1350
        %v1480 = vunpack.c.l.b16 %v1351
        %v1481 = vunpack.c.h.b16 %v1351
        %v1482 = vunpack.c.l.b16 %v1352
        %v1483 = vunpack.c.h.b16 %v1352
        %v1484 = vunpack.c.l.b16 %v1353
        %v1485 = vunpack.c.h.b16 %v1353
        %v1486 = vunpack.c.l.b16 %v1354
        %v1487 = vunpack.c.h.b16 %v1354
        %v1488 = vunpack.c.l.b16 %v1355
        %v1489 = vunpack.c.h.b16 %v1355
        %v1490 = vunpack.c.l.b16 %v1356
        %v1491 = vunpack.c.h.b16 %v1356
        %v1492 = vunpack.c.l.b16 %v1357
        %v1493 = vunpack.c.h.b16 %v1357
        %v1494 = vunpack.c.l.b16 %v1358
        %v1495 = vunpack.c.h.b16 %v1358
        %v1496 = vunpack.c.l.b16 %v1359
        %v1497 = vunpack.c.h.b16 %v1359
        %v1498 = vunpack.c.l.b16 %v1360
        %v1499 = vunpack.c.h.b16 %v1360
        %v1500 = vunpack.c.l.b16 %v1361
        %v1501 = vunpack.c.h.b16 %v1361
        %v1502 = vunpack.c.l.b16 %v1362
        %v1503 = vunpack.c.h.b16 %v1362
        %v1504 = vunpack.c.l.b16 %v1363
        %v1505 = vunpack.c.h.b16 %v1363
        %v1506 = vunpack.c.l.b16 %v1364
        %v1507 = vunpack.c.h.b16 %v1364
        %v1508 = vunpack.c.l.b16 %v1365
        %v1509 = vunpack.c.h.b16 %v1365
        %v1510 = vpack.c.b16 %v1416, %v1414
        %v1511 = vpack.c.b16 %v1417, %v1415
        %v1512 = vpack.c.b16 %v1420, %v1418
        %v1513 = vpack.c.b16 %v1421, %v1419
        %v1514 = vpack.c.b16 %v1424, %v1422
        %v1515 = vpack.c.b16 %v1425, %v1423
        %v1516 = vpack.c.b16 %v1428, %v1426
        %v1517 = vpack.c.b16 %v1429, %v1427
        %v1518 = vpack.c.b16 %v1432, %v1430
        %v1519 = vpack.c.b16 %v1433, %v1431
        %v1520 = vpack.c.b16 %v1436, %v1434
        %v1521 = vpack.c.b16 %v1437, %v1435
        %v1522 = vpack.c.b16 %v1440, %v1438
        %v1523 = vpack.c.b16 %v1441, %v1439
        %v1524 = vpack.c.b16 %v1444, %v1442
        %v1525 = vpack.c.b16 %v1445, %v1443
        %v1526 = vpack.c.b16 %v1448, %v1446
        %v1527 = vpack.c.b16 %v1449, %v1447
        %v1528 = vpack.c.b16 %v1452, %v1450
        %v1529 = vpack.c.b16 %v1453, %v1451
        %v1530 = vpack.c.b16 %v1456, %v1454
        %v1531 = vpack.c.b16 %v1457, %v1455
        %v1532 = vpack.c.b16 %v1460, %v1458
        %v1533 = vpack.c.b16 %v1461, %v1459
        %v1534 = vpack.c.b16 %v1464, %v1462
        %v1535 = vpack.c.b16 %v1465, %v1463
        %v1536 = vpack.c.b16 %v1468, %v1466
        %v1537 = vpack.c.b16 %v1469, %v1467
        %v1538 = vpack.c.b16 %v1472, %v1470
        %v1539 = vpack.c.b16 %v1473, %v1471
        %v1540 = vpack.c.b16 %v1476, %v1474
        %v1541 = vpack.c.b16 %v1477, %v1475
        %v1542 = vpack.c.b16 %v1480, %v1478
        %v1543 = vpack.c.b16 %v1481, %v1479
        %v1544 = vpack.c.b16 %v1484, %v1482
        %v1545 = vpack.c.b16 %v1485, %v1483
        %v1546 = vpack.c.b16 %v1488, %v1486
        %v1547 = vpack.c.b16 %v1489, %v1487
        %v1548 = vpack.c.b16 %v1492, %v1490
        %v1549 = vpack.c.b16 %v1493, %v1491
        %v1550 = vpack.c.b16 %v1496, %v1494
        %v1551 = vpack.c.b16 %v1497, %v1495
        %v1552 = vpack.c.b16 %v1500, %v1498
        %v1553 = vpack.c.b16 %v1501, %v1499
        %v1554 = vpack.c.b16 %v1504, %v1502
        %v1555 = vpack.c.b16 %v1505, %v1503
        %v1556 = vpack.c.b16 %v1508, %v1506
        %v1557 = vpack.c.b16 %v1509, %v1507
        %1606 = vmatprep.subr.bf16.mxu0 %v1511
        %1607 = vmatpush1.bf16.msra.mxu0 %v1510
        %1608 = vmatprep.subr.bf16.mxu0 %v1513
        %1609 = vmatpush1.bf16.msra.mxu0 %v1512
        %1610 = vmatprep.subr.bf16.mxu0 %v1515
        %1611 = vmatpush1.bf16.msra.mxu0 %v1514
        %1612 = vmatprep.subr.bf16.mxu0 %v1517
        %1613 = vmatpush1.bf16.msra.mxu0 %v1516
        %1614 = vmatprep.subr.bf16.mxu0 %v1519
        %1615 = vmatpush1.bf16.msra.mxu0 %v1518
        %1616 = vmatprep.subr.bf16.mxu0 %v1521
        %1617 = vmatpush1.bf16.msra.mxu0 %v1520
        %1618 = vmatprep.subr.bf16.mxu0 %v1523
        %1619 = vmatpush1.bf16.msra.mxu0 %v1522
        %1620 = vmatprep.subr.bf16.mxu0 %v1525
        %1621 = vmatpush1.bf16.msra.mxu0 %v1524
        %1622 = vmatprep.subr.bf16.mxu0 %v1527
        %1623 = vmatpush1.bf16.msra.mxu0 %v1526
        %1624 = vmatprep.subr.bf16.mxu0 %v1529
        %1625 = vmatpush1.bf16.msra.mxu0 %v1528
        %1626 = vmatprep.subr.bf16.mxu0 %v1531
        %1627 = vmatpush1.bf16.msra.mxu0 %v1530
        %1628 = vmatprep.subr.bf16.mxu0 %v1533
        %1629 = vmatpush1.bf16.msra.mxu0 %v1532
        %1630 = vmatprep.subr.bf16.mxu0 %v1535
        %1631 = vmatpush1.bf16.msra.mxu0 %v1534
        %1632 = vmatprep.subr.bf16.mxu0 %v1537
        %1633 = vmatpush1.bf16.msra.mxu0 %v1536
        %1634 = vmatprep.subr.bf16.mxu0 %v1539
        %1635 = vmatpush1.bf16.msra.mxu0 %v1538
        %1636 = vmatprep.subr.bf16.mxu0 %v1541
        %1637 = vmatpush1.bf16.msra.mxu0 %v1540
        %1638 = vmatprep.mubr.bf16.mxu0 %v1303
        %1639 = vmatmul.mubr.bf16.gmra.mrb[0].mxu0 %v1302
        %v1640 = vpop.f32.mrb[0].mxu0
        %v1641 = vadd.f32 0.0, %v1640
        %v1642 = vpop.f32.mrb[0].mxu0
        %v1643 = vadd.f32 0.0, %v1642
        %v1644 = vpop.f32.mrb[0].mxu0
        %v1645 = vadd.f32 0.0, %v1644
        %v1646 = vpop.f32.mrb[0].mxu0
        %v1647 = vadd.f32 0.0, %v1646
        %1648 = vmatprep.mubr.bf16.mxu0 %v1305
        %1649 = vmatmul.mubr.bf16.gmra.mrb[0].mxu0 %v1304
        %v1650 = vpop.f32.mrb[0].mxu0
        %v1651 = vadd.f32 0.0, %v1650
        %v1652 = vpop.f32.mrb[0].mxu0
        %v1653 = vadd.f32 0.0, %v1652
        %v1654 = vpop.f32.mrb[0].mxu0
        %v1655 = vadd.f32 0.0, %v1654
        %v1656 = vpop.f32.mrb[0].mxu0
        %v1657 = vadd.f32 0.0, %v1656
        %1658 = vmatprep.mubr.bf16.mxu0 %v1307
        %1659 = vmatmul.mubr.bf16.gmra.mrb[0].mxu0 %v1306
        %v1660 = vpop.f32.mrb[0].mxu0
        %v1661 = vadd.f32 0.0, %v1660
        %v1662 = vpop.f32.mrb[0].mxu0
        %v1663 = vadd.f32 0.0, %v1662
        %v1664 = vpop.f32.mrb[0].mxu0
        %v1665 = vadd.f32 0.0, %v1664
        %v1666 = vpop.f32.mrb[0].mxu0
        %v1667 = vadd.f32 0.0, %v1666
        %1668 = vmatprep.mubr.bf16.mxu0 %v1309
        %1669 = vmatmul.mubr.bf16.gmra.mrb[0].mxu0 %v1308
        %v1670 = vpop.f32.mrb[0].mxu0
        %v1671 = vadd.f32 0.0, %v1670
        %v1672 = vpop.f32.mrb[0].mxu0
        %v1673 = vadd.f32 0.0, %v1672
        %v1674 = vpop.f32.mrb[0].mxu0
        %v1675 = vadd.f32 0.0, %v1674
        %v1676 = vpop.f32.mrb[0].mxu0
        %v1677 = vadd.f32 0.0, %v1676
        %1678 = vmatprep.mubr.bf16.mxu0 %v1311
        %1679 = vmatmul.mubr.bf16.gmra.mrb[0].mxu0 %v1310
        %v1680 = vpop.f32.mrb[0].mxu0
        %v1681 = vadd.f32 0.0, %v1680
        %v1682 = vpop.f32.mrb[0].mxu0
        %v1683 = vadd.f32 0.0, %v1682
        %v1684 = vpop.f32.mrb[0].mxu0
        %v1685 = vadd.f32 0.0, %v1684
        %v1686 = vpop.f32.mrb[0].mxu0
        %v1687 = vadd.f32 0.0, %v1686
        %1688 = vmatprep.mubr.bf16.mxu0 %v1313
        %1689 = vmatmul.mubr.bf16.gmra.mrb[0].mxu0 %v1312
        %v1690 = vpop.f32.mrb[0].mxu0
        %v1691 = vadd.f32 0.0, %v1690
        %v1692 = vpop.f32.mrb[0].mxu0
        %v1693 = vadd.f32 0.0, %v1692
        %v1694 = vpop.f32.mrb[0].mxu0
        %v1695 = vadd.f32 0.0, %v1694
        %v1696 = vpop.f32.mrb[0].mxu0
        %v1697 = vadd.f32 0.0, %v1696
        %1698 = vmatprep.mubr.bf16.mxu0 %v1315
        %1699 = vmatmul.mubr.bf16.gmra.mrb[0].mxu0 %v1314
        %v1700 = vpop.f32.mrb[0].mxu0
        %v1701 = vadd.f32 0.0, %v1700
        %v1702 = vpop.f32.mrb[0].mxu0
        %v1703 = vadd.f32 0.0, %v1702
        %v1704 = vpop.f32.mrb[0].mxu0
        %v1705 = vadd.f32 0.0, %v1704
        %v1706 = vpop.f32.mrb[0].mxu0
        %v1707 = vadd.f32 0.0, %v1706
        %1708 = vmatprep.mubr.bf16.mxu0 %v1317
        %1709 = vmatmul.mubr.bf16.gmra.mrb[0].mxu0 %v1316
        %v1710 = vpop.f32.mrb[0].mxu0
        %v1711 = vadd.f32 0.0, %v1710
        %v1712 = vpop.f32.mrb[0].mxu0
        %v1713 = vadd.f32 0.0, %v1712
        %v1714 = vpop.f32.mrb[0].mxu0
        %v1715 = vadd.f32 0.0, %v1714
        %v1716 = vpop.f32.mrb[0].mxu0
        %v1717 = vadd.f32 0.0, %v1716
        %1718 = vdwg.mxu0
        %1719 = vmatprep.subr.bf16.mxu0 %v1543
        %1720 = vmatpush1.bf16.msra.mxu0 %v1542
        %1721 = vmatprep.subr.bf16.mxu0 %v1545
        %1722 = vmatpush1.bf16.msra.mxu0 %v1544
        %1723 = vmatprep.subr.bf16.mxu0 %v1547
        %1724 = vmatpush1.bf16.msra.mxu0 %v1546
        %1725 = vmatprep.subr.bf16.mxu0 %v1549
        %1726 = vmatpush1.bf16.msra.mxu0 %v1548
        %1727 = vmatprep.subr.bf16.mxu0 %v1551
        %1728 = vmatpush1.bf16.msra.mxu0 %v1550
        %1729 = vmatprep.subr.bf16.mxu0 %v1553
        %1730 = vmatpush1.bf16.msra.mxu0 %v1552
        %1731 = vmatprep.subr.bf16.mxu0 %v1555
        %1732 = vmatpush1.bf16.msra.mxu0 %v1554
        %1733 = vmatprep.subr.bf16.mxu0 %v1557
        %1734 = vmatpush1.bf16.msra.mxu0 %v1556
        %1735 = vmatprep.subr.bf16.mxu0 0
        %1736 = vmatpush1.bf16.msra.mxu0 0
        %1737 = vmatprep.subr.bf16.mxu0 0
        %1738 = vmatpush1.bf16.msra.mxu0 0
        %1739 = vmatprep.subr.bf16.mxu0 0
        %1740 = vmatpush1.bf16.msra.mxu0 0
        %1741 = vmatprep.subr.bf16.mxu0 0
        %1742 = vmatpush1.bf16.msra.mxu0 0
        %1743 = vmatprep.subr.bf16.mxu0 0
        %1744 = vmatpush1.bf16.msra.mxu0 0
        %1745 = vmatprep.subr.bf16.mxu0 0
        %1746 = vmatpush1.bf16.msra.mxu0 0
        %1747 = vmatprep.subr.bf16.mxu0 0
        %1748 = vmatpush1.bf16.msra.mxu0 0
        %1749 = vmatprep.subr.bf16.mxu0 0
        %1750 = vmatpush1.bf16.msra.mxu0 0
        %1751 = vmatprep.mubr.bf16.mxu0 0
        %1752 = vmatmul.mubr.bf16.gmra.mrb[0].mxu0 %v491
        %v1753 = vpop.f32.mrb[0].mxu0
        %v1754 = vadd.f32 %v1641, %v1753
        %v1755 = vpop.f32.mrb[0].mxu0
        %v1756 = vadd.f32 %v1643, %v1755
        %v1757 = vpop.f32.mrb[0].mxu0
        %v1758 = vadd.f32 %v1645, %v1757
        %v1759 = vpop.f32.mrb[0].mxu0
        %v1760 = vadd.f32 %v1647, %v1759
        %1761 = vmatprep.mubr.bf16.mxu0 0
        %1762 = vmatmul.mubr.bf16.gmra.mrb[0].mxu0 %v492
        %v1763 = vpop.f32.mrb[0].mxu0
        %v1764 = vadd.f32 %v1651, %v1763
        %v1765 = vpop.f32.mrb[0].mxu0
        %v1766 = vadd.f32 %v1653, %v1765
        %v1767 = vpop.f32.mrb[0].mxu0
        %v1768 = vadd.f32 %v1655, %v1767
        %v1769 = vpop.f32.mrb[0].mxu0
        %v1770 = vadd.f32 %v1657, %v1769
        %1771 = vmatprep.mubr.bf16.mxu0 0
        %1772 = vmatmul.mubr.bf16.gmra.mrb[0].mxu0 %v493
        %v1773 = vpop.f32.mrb[0].mxu0
        %v1774 = vadd.f32 %v1661, %v1773
        %v1775 = vpop.f32.mrb[0].mxu0
        %v1776 = vadd.f32 %v1663, %v1775
        %v1777 = vpop.f32.mrb[0].mxu0
        %v1778 = vadd.f32 %v1665, %v1777
        %v1779 = vpop.f32.mrb[0].mxu0
        %v1780 = vadd.f32 %v1667, %v1779
        %1781 = vmatprep.mubr.bf16.mxu0 0
        %1782 = vmatmul.mubr.bf16.gmra.mrb[0].mxu0 %v494
        %v1783 = vpop.f32.mrb[0].mxu0
        %v1784 = vadd.f32 %v1671, %v1783
        %v1785 = vpop.f32.mrb[0].mxu0
        %v1786 = vadd.f32 %v1673, %v1785
        %v1787 = vpop.f32.mrb[0].mxu0
        %v1788 = vadd.f32 %v1675, %v1787
        %v1789 = vpop.f32.mrb[0].mxu0
        %v1790 = vadd.f32 %v1677, %v1789
        %1791 = vmatprep.mubr.bf16.mxu0 0
        %1792 = vmatmul.mubr.bf16.gmra.mrb[0].mxu0 %v495
        %v1793 = vpop.f32.mrb[0].mxu0
        %v1794 = vadd.f32 %v1681, %v1793
        %v1795 = vpop.f32.mrb[0].mxu0
        %v1796 = vadd.f32 %v1683, %v1795
        %v1797 = vpop.f32.mrb[0].mxu0
        %v1798 = vadd.f32 %v1685, %v1797
        %v1799 = vpop.f32.mrb[0].mxu0
        %v1800 = vadd.f32 %v1687, %v1799
        %1801 = vmatprep.mubr.bf16.mxu0 0
        %1802 = vmatmul.mubr.bf16.gmra.mrb[0].mxu0 %v496
        %v1803 = vpop.f32.mrb[0].mxu0
        %v1804 = vadd.f32 %v1691, %v1803
        %v1805 = vpop.f32.mrb[0].mxu0
        %v1806 = vadd.f32 %v1693, %v1805
        %v1807 = vpop.f32.mrb[0].mxu0
        %v1808 = vadd.f32 %v1695, %v1807
        %v1809 = vpop.f32.mrb[0].mxu0
        %v1810 = vadd.f32 %v1697, %v1809
        %1811 = vmatprep.mubr.bf16.mxu0 0
        %1812 = vmatmul.mubr.bf16.gmra.mrb[0].mxu0 %v497
        %v1813 = vpop.f32.mrb[0].mxu0
        %v1814 = vadd.f32 %v1701, %v1813
        %v1815 = vpop.f32.mrb[0].mxu0
        %v1816 = vadd.f32 %v1703, %v1815
        %v1817 = vpop.f32.mrb[0].mxu0
        %v1818 = vadd.f32 %v1705, %v1817
        %v1819 = vpop.f32.mrb[0].mxu0
        %v1820 = vadd.f32 %v1707, %v1819
        %1821 = vmatprep.mubr.bf16.mxu0 0
        %1822 = vmatmul.mubr.bf16.gmra.mrb[0].mxu0 %v498
        %v1823 = vpop.f32.mrb[0].mxu0
        %v1824 = vadd.f32 %v1711, %v1823
        %v1825 = vpop.f32.mrb[0].mxu0
        %v1826 = vadd.f32 %v1713, %v1825
        %v1827 = vpop.f32.mrb[0].mxu0
        %v1828 = vadd.f32 %v1715, %v1827
        %v1829 = vpop.f32.mrb[0].mxu0
        %v1830 = vadd.f32 %v1717, %v1829
        %1831 = vdwg.mxu0
        %v1832 = vmax.f32 %v1754, 0.0
        %v1833 = vmax.f32 %v1756, 0.0
        %v1834 = vmax.f32 %v1758, 0.0
        %v1835 = vmax.f32 %v1760, 0.0
        %v1836 = vmax.f32 %v1764, 0.0
        %v1837 = vmax.f32 %v1766, 0.0
        %v1838 = vmax.f32 %v1768, 0.0
        %v1839 = vmax.f32 %v1770, 0.0
        %v1840 = vmax.f32 %v1774, 0.0
        %v1841 = vmax.f32 %v1776, 0.0
        %v1842 = vmax.f32 %v1778, 0.0
        %v1843 = vmax.f32 %v1780, 0.0
        %v1844 = vmax.f32 %v1784, 0.0
        %v1845 = vmax.f32 %v1786, 0.0
        %v1846 = vmax.f32 %v1788, 0.0
        %v1847 = vmax.f32 %v1790, 0.0
        %v1848 = vmax.f32 %v1794, 0.0
        %v1849 = vmax.f32 %v1796, 0.0
        %v1850 = vmax.f32 %v1798, 0.0
        %v1851 = vmax.f32 %v1800, 0.0
        %v1852 = vmax.f32 %v1804, 0.0
        %v1853 = vmax.f32 %v1806, 0.0
        %v1854 = vmax.f32 %v1808, 0.0
        %v1855 = vmax.f32 %v1810, 0.0
        %v1856 = vmax.f32 %v1814, 0.0
        %v1857 = vmax.f32 %v1816, 0.0
        %v1858 = vmax.f32 %v1818, 0.0
        %v1859 = vmax.f32 %v1820, 0.0
        %v1860 = vmax.f32 %v1824, 0.0
        %v1861 = vmax.f32 %v1826, 0.0
        %v1862 = vmax.f32 %v1828, 0.0
        %v1863 = vmax.f32 %v1830, 0.0
        %v1864 = vpack.c.bf16 %v1834, %v1832
        %v1865 = vpack.c.bf16 %v1835, %v1833
        %v1866 = vpack.c.bf16 %v1838, %v1836
        %v1867 = vpack.c.bf16 %v1839, %v1837
        %v1868 = vpack.c.bf16 %v1842, %v1840
        %v1869 = vpack.c.bf16 %v1843, %v1841
        %v1870 = vpack.c.bf16 %v1846, %v1844
        %v1871 = vpack.c.bf16 %v1847, %v1845
        %v1872 = vpack.c.bf16 %v1850, %v1848
        %v1873 = vpack.c.bf16 %v1851, %v1849
        %v1874 = vpack.c.bf16 %v1854, %v1852
        %v1875 = vpack.c.bf16 %v1855, %v1853
        %v1876 = vpack.c.bf16 %v1858, %v1856
        %v1877 = vpack.c.bf16 %v1859, %v1857
        %v1878 = vpack.c.bf16 %v1862, %v1860
        %v1879 = vpack.c.bf16 %v1863, %v1861
        %v1880 = vld [vmem:[%s5] sm:$0xf]
        %v1881 = vld [vmem:[%s5 + $0x4] sm:$0xf]
        %v1882 = vld [vmem:[%s5 + $0x8] sm:$0xf]
        %v1883 = vld [vmem:[%s5 + $0xc] sm:$0xf]
        %v1884 = vld [vmem:[%s5 + $0x10] sm:$0xf]
        %v1885 = vld [vmem:[%s5 + $0x14] sm:$0xf]
        %v1886 = vld [vmem:[%s5 + $0x18] sm:$0xf]
        %v1887 = vld [vmem:[%s5 + $0x1c] sm:$0xf]
        %v1888 = vld [vmem:[%s5 + $0x20] sm:$0xf]
        %v1889 = vld [vmem:[%s5 + $0x24] sm:$0xf]
        %v1890 = vld [vmem:[%s5 + $0x28] sm:$0xf]
        %v1891 = vld [vmem:[%s5 + $0x2c] sm:$0xf]
        %v1892 = vld [vmem:[%s5 + $0x30] sm:$0xf]
        %v1893 = vld [vmem:[%s5 + $0x34] sm:$0xf]
        %v1894 = vld [vmem:[%s5 + $0x38] sm:$0xf]
        %v1895 = vld [vmem:[%s5 + $0x3c] sm:$0xf]
        %v1896 = vld [vmem:[%s5 + $0x40] sm:$0xf]
        %v1897 = vld [vmem:[%s5 + $0x44] sm:$0xf]
        %v1898 = vld [vmem:[%s5 + $0x48] sm:$0xf]
        %v1899 = vld [vmem:[%s5 + $0x4c] sm:$0xf]
        %v1900 = vld [vmem:[%s5 + $0x50] sm:$0xf]
        %v1901 = vld [vmem:[%s5 + $0x54] sm:$0xf]
        %v1902 = vld [vmem:[%s5 + $0x58] sm:$0xf]
        %v1903 = vld [vmem:[%s5 + $0x5c] sm:$0xf]
        %v1904 = vld [vmem:[%s5 + $0x60] sm:$0xf]
        %v1905 = vld [vmem:[%s5 + $0x64] sm:$0xf]
        %v1906 = vld [vmem:[%s5 + $0x68] sm:$0xf]
        %v1907 = vld [vmem:[%s5 + $0x6c] sm:$0xf]
        %v1908 = vld [vmem:[%s5 + $0x70] sm:$0xf]
        %v1909 = vld [vmem:[%s5 + $0x74] sm:$0xf]
        %v1910 = vld [vmem:[%s5 + $0x78] sm:$0xf]
        %v1911 = vld [vmem:[%s5 + $0x7c] sm:$0xf]
        %v1912 = vld [vmem:[%s6] sm:$0x1]
        %v1914 = vlaneseq
        %v1915 = vshrl.u32 %v1914, 7
        %v1916 = vsub.s32 0, %v1915
        %v1917 = vrot.slane %v1912, %v1916
        %v1951 = vunpack.c.l.b16 %v1880
        %v1952 = vunpack.c.l.b16 %v1881
        %v1953 = vunpack.c.l.b16 %v1882
        %v1954 = vunpack.c.l.b16 %v1883
        %v1955 = vunpack.c.l.b16 %v1884
        %v1956 = vunpack.c.l.b16 %v1885
        %v1957 = vunpack.c.l.b16 %v1886
        %v1958 = vunpack.c.l.b16 %v1887
        %v1959 = vunpack.c.l.b16 %v1888
        %v1960 = vunpack.c.l.b16 %v1889
        %v1961 = vunpack.c.l.b16 %v1890
        %v1962 = vunpack.c.l.b16 %v1891
        %v1963 = vunpack.c.l.b16 %v1892
        %v1964 = vunpack.c.l.b16 %v1893
        %v1965 = vunpack.c.l.b16 %v1894
        %v1966 = vunpack.c.l.b16 %v1895
        %v1967 = vunpack.c.l.b16 %v1896
        %v1968 = vunpack.c.l.b16 %v1897
        %v1969 = vunpack.c.l.b16 %v1898
        %v1970 = vunpack.c.l.b16 %v1899
        %v1971 = vunpack.c.l.b16 %v1900
        %v1972 = vunpack.c.l.b16 %v1901
        %v1973 = vunpack.c.l.b16 %v1902
        %v1974 = vunpack.c.l.b16 %v1903
        %v1975 = vunpack.c.l.b16 %v1904
        %v1976 = vunpack.c.l.b16 %v1905
        %v1977 = vunpack.c.l.b16 %v1906
        %v1978 = vunpack.c.l.b16 %v1907
        %v1979 = vunpack.c.l.b16 %v1908
        %v1980 = vunpack.c.l.b16 %v1909
        %v1981 = vunpack.c.l.b16 %v1910
        %v1982 = vunpack.c.l.b16 %v1911
        %v1983 = vpack.c.b16 %v1952, %v1951
        %v1984 = vpack.c.b16 %v1954, %v1953
        %v1985 = vpack.c.b16 %v1956, %v1955
        %v1986 = vpack.c.b16 %v1958, %v1957
        %v1987 = vpack.c.b16 %v1960, %v1959
        %v1988 = vpack.c.b16 %v1962, %v1961
        %v1989 = vpack.c.b16 %v1964, %v1963
        %v1990 = vpack.c.b16 %v1966, %v1965
        %v1991 = vpack.c.b16 %v1968, %v1967
        %v1992 = vpack.c.b16 %v1970, %v1969
        %v1993 = vpack.c.b16 %v1972, %v1971
        %v1994 = vpack.c.b16 %v1974, %v1973
        %v1995 = vpack.c.b16 %v1976, %v1975
        %v1996 = vpack.c.b16 %v1978, %v1977
        %v1997 = vpack.c.b16 %v1980, %v1979
        %v1998 = vpack.c.b16 %v1982, %v1981
        %2015 = vmatprep.subr.bf16.mxu0 0
        %2016 = vmatpush1.bf16.msra.mxu0 %v1983
        %2017 = vmatprep.subr.bf16.mxu0 0
        %2018 = vmatpush1.bf16.msra.mxu0 %v1984
        %2019 = vmatprep.subr.bf16.mxu0 0
        %2020 = vmatpush1.bf16.msra.mxu0 %v1985
        %2021 = vmatprep.subr.bf16.mxu0 0
        %2022 = vmatpush1.bf16.msra.mxu0 %v1986
        %2023 = vmatprep.subr.bf16.mxu0 0
        %2024 = vmatpush1.bf16.msra.mxu0 %v1987
        %2025 = vmatprep.subr.bf16.mxu0 0
        %2026 = vmatpush1.bf16.msra.mxu0 %v1988
        %2027 = vmatprep.subr.bf16.mxu0 0
        %2028 = vmatpush1.bf16.msra.mxu0 %v1989
        %2029 = vmatprep.subr.bf16.mxu0 0
        %2030 = vmatpush1.bf16.msra.mxu0 %v1990
        %2031 = vmatprep.subr.bf16.mxu0 0
        %2032 = vmatpush1.bf16.msra.mxu0 %v1991
        %2033 = vmatprep.subr.bf16.mxu0 0
        %2034 = vmatpush1.bf16.msra.mxu0 %v1992
        %2035 = vmatprep.subr.bf16.mxu0 0
        %2036 = vmatpush1.bf16.msra.mxu0 %v1993
        %2037 = vmatprep.subr.bf16.mxu0 0
        %2038 = vmatpush1.bf16.msra.mxu0 %v1994
        %2039 = vmatprep.subr.bf16.mxu0 0
        %2040 = vmatpush1.bf16.msra.mxu0 %v1995
        %2041 = vmatprep.subr.bf16.mxu0 0
        %2042 = vmatpush1.bf16.msra.mxu0 %v1996
        %2043 = vmatprep.subr.bf16.mxu0 0
        %2044 = vmatpush1.bf16.msra.mxu0 %v1997
        %2045 = vmatprep.subr.bf16.mxu0 0
        %2046 = vmatpush1.bf16.msra.mxu0 %v1998
        %2047 = vmatprep.mubr.bf16.mxu0 %v1865
        %2048 = vmatmul.mubr.bf16.gmra.mrb[0].mxu0 %v1864
        %v2049 = vpop.f32.mrb[0].mxu0
        %v2050 = vadd.f32 %v1917, %v2049
        %v2051 = vpop.f32.mrb[0].mxu0
        %v2052 = vpop.f32.mrb[0].mxu0
        %v2053 = vadd.f32 %v1917, %v2052
        %v2054 = vpop.f32.mrb[0].mxu0
        %2055 = vmatprep.mubr.bf16.mxu0 %v1867
        %2056 = vmatmul.mubr.bf16.gmra.mrb[0].mxu0 %v1866
        %v2057 = vpop.f32.mrb[0].mxu0
        %v2058 = vadd.f32 %v1917, %v2057
        %v2059 = vpop.f32.mrb[0].mxu0
        %v2060 = vpop.f32.mrb[0].mxu0
        %v2061 = vadd.f32 %v1917, %v2060
        %v2062 = vpop.f32.mrb[0].mxu0
        %2063 = vmatprep.mubr.bf16.mxu0 %v1869
        %2064 = vmatmul.mubr.bf16.gmra.mrb[0].mxu0 %v1868
        %v2065 = vpop.f32.mrb[0].mxu0
        %v2066 = vadd.f32 %v1917, %v2065
        %v2067 = vpop.f32.mrb[0].mxu0
        %v2068 = vpop.f32.mrb[0].mxu0
        %v2069 = vadd.f32 %v1917, %v2068
        %v2070 = vpop.f32.mrb[0].mxu0
        %2071 = vmatprep.mubr.bf16.mxu0 %v1871
        %2072 = vmatmul.mubr.bf16.gmra.mrb[0].mxu0 %v1870
        %v2073 = vpop.f32.mrb[0].mxu0
        %v2074 = vadd.f32 %v1917, %v2073
        %v2075 = vpop.f32.mrb[0].mxu0
        %v2076 = vpop.f32.mrb[0].mxu0
        %v2077 = vadd.f32 %v1917, %v2076
        %v2078 = vpop.f32.mrb[0].mxu0
        %2079 = vmatprep.mubr.bf16.mxu0 %v1873
        %2080 = vmatmul.mubr.bf16.gmra.mrb[0].mxu0 %v1872
        %v2081 = vpop.f32.mrb[0].mxu0
        %v2082 = vadd.f32 %v1917, %v2081
        %v2083 = vpop.f32.mrb[0].mxu0
        %v2084 = vpop.f32.mrb[0].mxu0
        %v2085 = vadd.f32 %v1917, %v2084
        %v2086 = vpop.f32.mrb[0].mxu0
        %2087 = vmatprep.mubr.bf16.mxu0 %v1875
        %2088 = vmatmul.mubr.bf16.gmra.mrb[0].mxu0 %v1874
        %v2089 = vpop.f32.mrb[0].mxu0
        %v2090 = vadd.f32 %v1917, %v2089
        %v2091 = vpop.f32.mrb[0].mxu0
        %v2092 = vpop.f32.mrb[0].mxu0
        %v2093 = vadd.f32 %v1917, %v2092
        %v2094 = vpop.f32.mrb[0].mxu0
        %2095 = vmatprep.mubr.bf16.mxu0 %v1877
        %2096 = vmatmul.mubr.bf16.gmra.mrb[0].mxu0 %v1876
        %v2097 = vpop.f32.mrb[0].mxu0
        %v2098 = vadd.f32 %v1917, %v2097
        %v2099 = vpop.f32.mrb[0].mxu0
        %v2100 = vpop.f32.mrb[0].mxu0
        %v2101 = vadd.f32 %v1917, %v2100
        %v2102 = vpop.f32.mrb[0].mxu0
        %2103 = vmatprep.mubr.bf16.mxu0 %v1879
        %2104 = vmatmul.mubr.bf16.gmra.mrb[0].mxu0 %v1878
        %v2105 = vpop.f32.mrb[0].mxu0
        %v2106 = vadd.f32 %v1917, %v2105
        %v2107 = vpop.f32.mrb[0].mxu0
        %v2108 = vpop.f32.mrb[0].mxu0
        %v2109 = vadd.f32 %v1917, %v2108
        %v2110 = vpop.f32.mrb[0].mxu0
        %2111 = vdwg.mxu0
        %2112 = vst [vmem:[%s288] sm:$0xff] %v2050
        %2113 = vst [vmem:[%s288 + $0x8] sm:$0xff] %v2053
        %2114 = vst [vmem:[%s288 + $0x10] sm:$0xff] %v2058
        %2115 = vst [vmem:[%s288 + $0x18] sm:$0xff] %v2061
        %2116 = vst [vmem:[%s288 + $0x20] sm:$0xff] %v2066
        %2117 = vst [vmem:[%s288 + $0x28] sm:$0xff] %v2069
        %2118 = vst [vmem:[%s288 + $0x30] sm:$0xff] %v2074
        %2119 = vst [vmem:[%s288 + $0x38] sm:$0xff] %v2077
        %2120 = vst [vmem:[%s288 + $0x40] sm:$0xff] %v2082
        %2121 = vst [vmem:[%s288 + $0x48] sm:$0xff] %v2085
        %2122 = vst [vmem:[%s288 + $0x50] sm:$0xff] %v2090
        %2123 = vst [vmem:[%s288 + $0x58] sm:$0xff] %v2093
        %2124 = vst [vmem:[%s288 + $0x60] sm:$0xff] %v2098
        %2125 = vst [vmem:[%s288 + $0x68] sm:$0xff] %v2101
        %2126 = vst [vmem:[%s288 + $0x70] sm:$0xff] %v2106
        %2127 = vst [vmem:[%s288 + $0x78] sm:$0xff] %v2109
        %s2128 = sand.u32 %s186, 1
        %s2129 = scalar_lea.sflag [#allocation3], %s2128
        %s2130 = sand.u32 %s186, 1
        %s2131 = smul.addr %s2130, 128
        %s2132 = scalar_lea.vmem [#allocation2], %s2131
        // Predicated region
        $region49: #{tpu_custom_call.1} parent=47 // pred_check
          %p2133 = pneg %p196
        $region50: #{tpu_custom_call.1} parent=47 // pred_check_branch
          %2135 = sbr.rel (%p2133) target = $region52
        $region51: #{tpu_custom_call.1} parent=47 // pred_region
          %s2136 = smul.u32 16, %s21
          %s2138 = ssub.s32 2048, 2048
          %2139 = vsyncadd %s2129, %s2138
          %s2140 = smul.addr %s2136, 128
          %s2141 = scalar_lea.hbm %s7, %s2140
          %s2142 = sshll.u32 %s2132, 4
          %s2143 = int_to_ptr.vmem [resolvable:$true] %s2142
          %2148 = dma.vmem_to_hbm [thread:$0]  %s2143, 2048, %s2141, %s2129, 128, 128, 8
        $region52: #{tpu_custom_call.1} parent=47 // pred_fallthru
          _
      $region48: #{tpu_custom_call.1} parent=5 // pred_fallthru
        _
      %p2149 = scmp.le.s32.totalorder 2, %s16
      // Predicated region
      $region53: #{tpu_custom_call.1} parent=5 // pred_check
        %p2150 = pneg %p2149
      $region54: #{tpu_custom_call.1} parent=5 // pred_check_branch
        %2152 = sbr.rel (%p2150) target = $region56
      $region55: #{tpu_custom_call.1} parent=5 // pred_region
        %s2153 = ssub.s32 %s16, 2
        // Predicated region
        $region57: #{tpu_custom_call.1} parent=55 // pred_check
          %p2154 = pneg %p202
        $region58: #{tpu_custom_call.1} parent=55 // pred_check_branch
          %2156 = sbr.rel (%p2154) target = $region60
        $region59: #{tpu_custom_call.1} parent=55 // pred_region
          %s2157 = sand.u32 %s187, 1
          %s2158 = scalar_lea.sflag [#allocation3], %s2157
          %s2159 = sand.u32 %s187, 1
          %s2160 = smul.addr %s2159, 128
          %s2161 = scalar_lea.vmem [#allocation2], %s2160
          %2162 = dma.done %s2158, 2048
        $region60: #{tpu_custom_call.1} parent=55 // pred_fallthru
          _
      $region56: #{tpu_custom_call.1} parent=5 // pred_fallthru
        _
    $region6: #{tpu_custom_call.1} parent=1 // loop_footer
      %s20 = sadd.s32 1, %s16
    $region7: #{tpu_custom_call.1} parent=1 // loop_footer_branch
      %15 = sbr.rel target = $region3
    $region8: #{tpu_custom_call.1} parent=1 // loop_exit
      _
    %2163 = vsyncpa [#allocation3], 1
    %s2164 = scalar_lea.sflag [#allocation3], 1
    %2165 = vsyncpa %s2164, 1

</llo_original>
